<compile_context>
chip_gen: v6e
topology: v6e:2x2x1
jax: 0.10.0
libtpu: 0.0.40
codegen_flags: <defaults>
</compile_context>

<pallas_src>
import jax
import jax.numpy as jnp
from jax.experimental import pallas as pl
from jax.experimental.pallas import tpu as pltpu

INPUT_SIZE = 8                  # N top features from the RandomForest selection
HIDDEN_SIZES = [128, 64, 32, 16]
OUTPUT_SIZE = 4
NEG_SLOPE = 0.01                # nn.LeakyReLU default negative_slope

PAD_WIDTH = 128                                    # lane-dense width for every intermediate
K_DIMS = (INPUT_SIZE, 128, 128, 128, 128)          # kernel-side contraction dims (padded)
W_OFFS = (0, 16, 144, 272, 400)                    # row offsets, aligned to bf16 (16,128) tiles
W_ROWS = 528                                       # 16 + 4*128
BIAS_ROWS = 8                                      # 5 layers, padded to a multiple of 8


def _round_up(n, m):
    return ((n + m - 1) // m) * m


def _default_bf16_vpu():
    """bf16 elementwise path only on chips with a bf16 VPU (v6e / v7x); f32 otherwise."""
    try:
        kind = jax.devices()[0].device_kind.lower()
        return not any(t in kind for t in ("v2", "v3", "v4", "v5"))
    except Exception:
        return False


def _make_kernel(use_bf16_vpu):
    act_dtype = jnp.bfloat16 if use_bf16_vpu else jnp.float32

    def mlp_kernel(x_ref, w_ref, b_ref, o_ref):
        """One batch tile: full 5-layer MLP, everything VMEM resident."""
        h = x_ref[...].astype(jnp.bfloat16)                       # (TB, 8) bf16 MXU feed
        # Hidden layers 0..3: bf16 matmul with f32 accumulation, then bias + LeakyReLU.
        for layer in range(4):
            off, k = W_OFFS[layer], K_DIMS[layer]
            z = jnp.dot(h, w_ref[off:off + k, :],
                        preferred_element_type=jnp.float32)       # (TB, 128) f32
            z = z.astype(act_dtype) + b_ref[layer:layer + 1, :].astype(act_dtype)
            z = jnp.maximum(z, NEG_SLOPE * z)                     # LeakyReLU (mul + max)
            # nn.Dropout(p=0.5) is identity in eval/inference mode.
            h = z.astype(jnp.bfloat16)
        # Final Linear (no activation) in f32; store only the 4 logical output lanes.
        off, k = W_OFFS[4], K_DIMS[4]
        z = jnp.dot(h, w_ref[off:off + k, :],
                    preferred_element_type=jnp.float32) + b_ref[4:5, :]
        o_ref[...] = z[:, :OUTPUT_SIZE]

    return mlp_kernel


def init_params(key):
    """Deterministic synthetic params with PyTorch Linear shapes, stored transposed as (in, out)."""
    sizes = [INPUT_SIZE] + HIDDEN_SIZES + [OUTPUT_SIZE]
    params = []
    for fan_in, fan_out in zip(sizes[:-1], sizes[1:]):
        key, kw, kb = jax.random.split(key, 3)
        bound = 1.0 / jnp.sqrt(fan_in)                      # mimic PyTorch default uniform bound
        w = jax.random.uniform(kw, (fan_in, fan_out), jnp.float32, -bound, bound)
        b = jax.random.uniform(kb, (1, fan_out), jnp.float32, -bound, bound)
        params.append((w, b))
    return params


def pack_params(params):
    """Pack all layers into one padded bf16 weight slab and one padded f32 bias slab.

    Padded rows/lanes are exactly zero so padded lanes stay 0 through LeakyReLU and never
    leak into the logical lanes of later layers.
    """
    w_slab = jnp.zeros((W_ROWS, PAD_WIDTH), jnp.float32)
    b_slab = jnp.zeros((BIAS_ROWS, PAD_WIDTH), jnp.float32)
    for i, (w, b) in enumerate(params):
        fan_in, fan_out = w.shape
        off = W_OFFS[i]
        w_slab = w_slab.at[off:off + fan_in, :fan_out].set(w)
        b_slab = b_slab.at[i, :fan_out].set(b[0])
    return w_slab.astype(jnp.bfloat16), b_slab


def _choose_tb(batch, tb_max):
    """Large tiles to amortize grid-step overhead, but keep >= 2 grid steps (megacore) and
    avoid over-padding tiny batches."""
    tb = min(tb_max, _round_up(pl.cdiv(batch, 2), 8))
    return max(tb, 8)


def ecosystem_health_predictor(x, packed_w, packed_b, *, tb=2048, use_bf16_vpu=None):
    """Batch-tiled forward pass. x: (B, INPUT_SIZE) f32. Returns (B, OUTPUT_SIZE) f32."""
    if use_bf16_vpu is None:
        use_bf16_vpu = _default_bf16_vpu()

    B = x.shape[0]
    tb = _choose_tb(B, tb)
    b_pad = _round_up(B, tb)
    if b_pad != B:
        x = jnp.pad(x, ((0, b_pad - B), (0, 0)))             # zero rows, sliced off below

    grid = (b_pad // tb,)
    out = pl.pallas_call(
        _make_kernel(use_bf16_vpu),
        out_shape=jax.ShapeDtypeStruct((b_pad, OUTPUT_SIZE), jnp.float32),
        grid_spec=pltpu.PrefetchScalarGridSpec(
            num_scalar_prefetch=0,
            grid=grid,
            in_specs=[
                pl.BlockSpec((tb, INPUT_SIZE), lambda i: (i, 0)),        # x: batch-tiled
                pl.BlockSpec((W_ROWS, PAD_WIDTH), lambda i: (0, 0)),     # weight slab: replicated
                pl.BlockSpec((BIAS_ROWS, PAD_WIDTH), lambda i: (0, 0)),  # bias slab: replicated
            ],
            out_specs=pl.BlockSpec((tb, OUTPUT_SIZE), lambda i: (i, 0)), # only logical lanes
        ),
        compiler_params=pltpu.CompilerParams(
            dimension_semantics=("parallel",)),               # both TCs on v7x
    )(x, packed_w, packed_b)

    return out[:B] if b_pad != B else out


def reference_forward(x, params, use_bf16_vpu):
    """Pure-JAX reference mimicking the kernel's numerics (bf16 MXU feed, f32 accumulation,
    activation path dtype matching the kernel's generation-dependent choice)."""
    act_dtype = jnp.bfloat16 if use_bf16_vpu else jnp.float32
    h = x.astype(jnp.bfloat16)
    for i, (w, b) in enumerate(params):
        z = jnp.dot(h, w.astype(jnp.bfloat16), preferred_element_type=jnp.float32)
        if i < len(params) - 1:
            z = z.astype(act_dtype) + b[0].astype(act_dtype)
            z = jnp.maximum(z, NEG_SLOPE * z)
            h = z.astype(jnp.bfloat16)
        else:
            h = z + b[0]
    return h.astype(jnp.float32)


if __name__ == "__main__":
    key = jax.random.PRNGKey(0)
    k_params, k_x = jax.random.split(key)

    params = init_params(k_params)
    packed_w, packed_b = pack_params(params)

    use_bf16_vpu = _default_bf16_vpu()

    batch = 500                                              # exercises tiling (2 tiles) + padding
    x = jax.random.normal(k_x, (batch, INPUT_SIZE), jnp.float32)

    out = ecosystem_health_predictor(x, packed_w, packed_b, use_bf16_vpu=use_bf16_vpu)
    out = jax.block_until_ready(out)

    ref = reference_forward(x, params, use_bf16_vpu)
    assert out.shape == (batch, OUTPUT_SIZE)
    assert jnp.allclose(out, ref, atol=1e-2, rtol=1e-2), "mismatch vs reference"

    print("KERNEL_OK")
</pallas_src>

<mosaic_0001>
module attributes {stable_mosaic.version = 11 : i64} {
  func.func @mlp_kernel(%arg0: i32, %arg1: memref<256x8xf32, #tpu.memory_space<vmem>>, %arg2: memref<528x128xbf16, #tpu.memory_space<vmem>>, %arg3: memref<8x128xf32, #tpu.memory_space<vmem>>, %arg4: memref<256x4xf32, #tpu.memory_space<vmem>>) attributes {dimension_semantics = [#tpu.dimension_semantics<parallel>], iteration_bounds = array<i64: 2>, scalar_prefetch = 0 : i64, scratch_operands = 0 : i64, tpu.core_type = #tpu.core_type<tc>, window_params = [{transform_indices = @transform_0, window_bounds = array<i64: 256, 8>}, {pipeline_mode = #tpu.pipeline_mode<synchronous>, transform_indices = @transform_1, window_bounds = array<i64: 528, 128>}, {pipeline_mode = #tpu.pipeline_mode<synchronous>, transform_indices = @transform_2, window_bounds = array<i64: 8, 128>}, {transform_indices = @transform_3, window_bounds = array<i64: 256, 4>}]} {
    %c0 = arith.constant 0 : index
    %c0_0 = arith.constant 0 : index
    %0 = vector.load %arg1[%c0, %c0_0] : memref<256x8xf32, #tpu.memory_space<vmem>>, vector<256x8xf32>
    %1 = arith.truncf %0 : vector<256x8xf32> to vector<256x8xbf16>
    %c0_1 = arith.constant 0 : index
    %c0_2 = arith.constant 0 : index
    %2 = vector.load %arg2[%c0_1, %c0_2] : memref<528x128xbf16, #tpu.memory_space<vmem>>, vector<8x128xbf16>
    %cst = arith.constant dense<0.000000e+00> : vector<256x128xf32>
    %3 = tpu.matmul %1, %2, %cst {dimension_numbers = #tpu.dot_dimension_numbers<[1], [0], [0], [1], [0, 0, 1, 1], [], []>} : vector<256x8xbf16>, vector<8x128xbf16>, vector<256x128xf32> -> vector<256x128xf32>
    %4 = arith.truncf %3 : vector<256x128xf32> to vector<256x128xbf16>
    %c0_3 = arith.constant 0 : index
    %c0_4 = arith.constant 0 : index
    %5 = vector.load %arg3[%c0_3, %c0_4] : memref<8x128xf32, #tpu.memory_space<vmem>>, vector<1x128xf32>
    %6 = arith.truncf %5 : vector<1x128xf32> to vector<1x128xbf16>
    %7 = vector.broadcast %6 : vector<1x128xbf16> to vector<256x128xbf16>
    %8 = arith.addf %4, %7 : vector<256x128xbf16>
    %cst_5 = arith.constant 1.000980e-02 : bf16
    %9 = vector.broadcast %cst_5 : bf16 to vector<256x128xbf16>
    %10 = arith.mulf %9, %8 : vector<256x128xbf16>
    %11 = arith.maximumf %8, %10 : vector<256x128xbf16>
    %c16 = arith.constant 16 : index
    %c0_6 = arith.constant 0 : index
    %12 = vector.load %arg2[%c16, %c0_6] : memref<528x128xbf16, #tpu.memory_space<vmem>>, vector<128x128xbf16>
    %cst_7 = arith.constant dense<0.000000e+00> : vector<256x128xf32>
    %13 = tpu.matmul %11, %12, %cst_7 {dimension_numbers = #tpu.dot_dimension_numbers<[1], [0], [0], [1], [0, 0, 1, 1], [], []>} : vector<256x128xbf16>, vector<128x128xbf16>, vector<256x128xf32> -> vector<256x128xf32>
    %14 = arith.truncf %13 : vector<256x128xf32> to vector<256x128xbf16>
    %c1 = arith.constant 1 : index
    %c0_8 = arith.constant 0 : index
    %15 = vector.load %arg3[%c1, %c0_8] : memref<8x128xf32, #tpu.memory_space<vmem>>, vector<1x128xf32>
    %16 = arith.truncf %15 : vector<1x128xf32> to vector<1x128xbf16>
    %17 = vector.broadcast %16 : vector<1x128xbf16> to vector<256x128xbf16>
    %18 = arith.addf %14, %17 : vector<256x128xbf16>
    %cst_9 = arith.constant 1.000980e-02 : bf16
    %19 = vector.broadcast %cst_9 : bf16 to vector<256x128xbf16>
    %20 = arith.mulf %19, %18 : vector<256x128xbf16>
    %21 = arith.maximumf %18, %20 : vector<256x128xbf16>
    %c144 = arith.constant 144 : index
    %c0_10 = arith.constant 0 : index
    %22 = vector.load %arg2[%c144, %c0_10] : memref<528x128xbf16, #tpu.memory_space<vmem>>, vector<128x128xbf16>
    %cst_11 = arith.constant dense<0.000000e+00> : vector<256x128xf32>
    %23 = tpu.matmul %21, %22, %cst_11 {dimension_numbers = #tpu.dot_dimension_numbers<[1], [0], [0], [1], [0, 0, 1, 1], [], []>} : vector<256x128xbf16>, vector<128x128xbf16>, vector<256x128xf32> -> vector<256x128xf32>
    %24 = arith.truncf %23 : vector<256x128xf32> to vector<256x128xbf16>
    %c2 = arith.constant 2 : index
    %c0_12 = arith.constant 0 : index
    %25 = vector.load %arg3[%c2, %c0_12] : memref<8x128xf32, #tpu.memory_space<vmem>>, vector<1x128xf32>
    %26 = arith.truncf %25 : vector<1x128xf32> to vector<1x128xbf16>
    %27 = vector.broadcast %26 : vector<1x128xbf16> to vector<256x128xbf16>
    %28 = arith.addf %24, %27 : vector<256x128xbf16>
    %cst_13 = arith.constant 1.000980e-02 : bf16
    %29 = vector.broadcast %cst_13 : bf16 to vector<256x128xbf16>
    %30 = arith.mulf %29, %28 : vector<256x128xbf16>
    %31 = arith.maximumf %28, %30 : vector<256x128xbf16>
    %c272 = arith.constant 272 : index
    %c0_14 = arith.constant 0 : index
    %32 = vector.load %arg2[%c272, %c0_14] : memref<528x128xbf16, #tpu.memory_space<vmem>>, vector<128x128xbf16>
    %cst_15 = arith.constant dense<0.000000e+00> : vector<256x128xf32>
    %33 = tpu.matmul %31, %32, %cst_15 {dimension_numbers = #tpu.dot_dimension_numbers<[1], [0], [0], [1], [0, 0, 1, 1], [], []>} : vector<256x128xbf16>, vector<128x128xbf16>, vector<256x128xf32> -> vector<256x128xf32>
    %34 = arith.truncf %33 : vector<256x128xf32> to vector<256x128xbf16>
    %c3 = arith.constant 3 : index
    %c0_16 = arith.constant 0 : index
    %35 = vector.load %arg3[%c3, %c0_16] : memref<8x128xf32, #tpu.memory_space<vmem>>, vector<1x128xf32>
    %36 = arith.truncf %35 : vector<1x128xf32> to vector<1x128xbf16>
    %37 = vector.broadcast %36 : vector<1x128xbf16> to vector<256x128xbf16>
    %38 = arith.addf %34, %37 : vector<256x128xbf16>
    %cst_17 = arith.constant 1.000980e-02 : bf16
    %39 = vector.broadcast %cst_17 : bf16 to vector<256x128xbf16>
    %40 = arith.mulf %39, %38 : vector<256x128xbf16>
    %41 = arith.maximumf %38, %40 : vector<256x128xbf16>
    %c400 = arith.constant 400 : index
    %c0_18 = arith.constant 0 : index
    %42 = vector.load %arg2[%c400, %c0_18] : memref<528x128xbf16, #tpu.memory_space<vmem>>, vector<128x128xbf16>
    %cst_19 = arith.constant dense<0.000000e+00> : vector<256x128xf32>
    %43 = tpu.matmul %41, %42, %cst_19 {dimension_numbers = #tpu.dot_dimension_numbers<[1], [0], [0], [1], [0, 0, 1, 1], [], []>} : vector<256x128xbf16>, vector<128x128xbf16>, vector<256x128xf32> -> vector<256x128xf32>
    %c4 = arith.constant 4 : index
    %c0_20 = arith.constant 0 : index
    %44 = vector.load %arg3[%c4, %c0_20] : memref<8x128xf32, #tpu.memory_space<vmem>>, vector<1x128xf32>
    %45 = vector.broadcast %44 : vector<1x128xf32> to vector<256x128xf32>
    %46 = arith.addf %43, %45 : vector<256x128xf32>
    %47 = vector.extract_strided_slice %46 {offsets = [0, 0], sizes = [256, 4], strides = [1, 1]} : vector<256x128xf32> to vector<256x4xf32>
    %c0_21 = arith.constant 0 : index
    %c0_22 = arith.constant 0 : index
    %48 = vector.load %arg4[%c0_21, %c0_22] : memref<256x4xf32, #tpu.memory_space<vmem>>, vector<256x4xf32>
    tpu.vector_store %arg4[%c0_21, %c0_22], %47 {strides = array<i32>} : memref<256x4xf32, #tpu.memory_space<vmem>>, vector<256x4xf32>,
    return
  }
  func.func @transform_0(%arg0: i32) -> (i32, i32) {
    %c0_i32 = arith.constant 0 : i32
    %c0_i32_0 = arith.constant 0 : i32
    return %arg0, %c0_i32 : i32, i32
  }
  func.func @transform_1(%arg0: i32) -> (i32, i32) {
    %c0_i32 = arith.constant 0 : i32
    %c0_i32_0 = arith.constant 0 : i32
    %c0_i32_1 = arith.constant 0 : i32
    return %c0_i32, %c0_i32_0 : i32, i32
  }
  func.func @transform_2(%arg0: i32) -> (i32, i32) {
    %c0_i32 = arith.constant 0 : i32
    %c0_i32_0 = arith.constant 0 : i32
    %c0_i32_1 = arith.constant 0 : i32
    return %c0_i32, %c0_i32_0 : i32, i32
  }
  func.func @transform_3(%arg0: i32) -> (i32, i32) {
    %c0_i32 = arith.constant 0 : i32
    %c0_i32_0 = arith.constant 0 : i32
    return %arg0, %c0_i32 : i32, i32
  }
}

</mosaic_0001>

<llo_original>
// kernel: tpu_custom_call.1
$region0: #{tpu_custom_call.1}
  #allocation0 [shape = 'u32[]', space=smem, size = 0x4, offset = 0x4, fixed_abs, tag = 'smem constant byte address 0x4 - core index']
  #allocation1 [shape = 'u32[144,128]{1,0:T(1,128)}', space=vmem, size = 0x12000, scoped, tag = 'internal scratch']
  %s0 = inlined_call_operand.vmem [shape: f32[512,8], index: 0, kind: input, shape index: {}]
  %s1 = inlined_call_operand.vmem [shape: bf16[528,128], index: 1, kind: input, shape index: {}]
  %s2 = inlined_call_operand.vmem [shape: f32[8,128], index: 2, kind: input, shape index: {}]
  %s3 = inlined_call_operand.vmem [shape: f32[512,4], index: 3, kind: output, shape index: {}]
  %s4 = sld [smem:[#allocation0]]
  $region45: #{tpu_custom_call.1} parent=0
    _
  %s6 = ssub.s32 1, %s4
  %s7 = scalar_select 0, %s6, %s4
  loop: start=0, step=1, limit=4
  $region2: #{tpu_custom_call.1} parent=0 // loop_pre_header
    _
  $region3: #{tpu_custom_call.1} parent=0 // loop_header
    %s9 = sphi 0, %s13
    %p10 = scmp.ge.s32.totalorder %s9, 4
    %s19 = sphi 0, %s21
    %s22 = sphi 0, %s19
    %s23 = sphi 0, %s22
    %s39 = sphi 0, %s23
    %s43 = sphi 0, %s43
    %s45 = sphi 0, %s43
    %s46 = sphi 0, %s45
    %s60 = sphi 0, %s46
    %s64 = sphi 0, %s64
    %s66 = sphi 0, %s64
    %s67 = sphi 0, %s66
    %s81 = sphi 0, %s67
    %s87 = sphi 0, %s89
    %s90 = sphi 0, %s87
    %s91 = sphi 0, %s90
    %s107 = sphi 0, %s91
  $region4: #{tpu_custom_call.1} parent=0 // loop_header_branch
    %12 = sbr.rel (%p10) target = $region8
  $region5: #{tpu_custom_call.1} parent=0 // loop_body
    %s14 = ssub.s32 %s9, 1
    %s15 = ssub.s32 %s9, 2
    %s16 = sadd.s32 %s9, 1
    %s17 = ssub.s32 %s9, %s16
    %p18 = scmp.eq.s32.totalorder %s17, 0
    %s20 = sadd.s32 %s19, 1
    %s21 = scalar_select %p18, %s19, %s20
    %p24 = pneg %p18
    %p25 = scmp.eq.s32.totalorder %s9, 1
    %p26 = por %p24, %p25
    %p27 = scmp.ne.s32.totalorder %s19, %s22
    %p28 = scmp.eq.s32.totalorder %s9, 0
    %p29 = por %p27, %p28
    %p30 = scmp.ne.s32.totalorder %s19, %s22
    %p31 = scmp.eq.s32.totalorder %s14, 1
    %p32 = por %p30, %p31
    %p33 = scmp.ne.s32.totalorder %s22, %s23
    %p34 = scmp.eq.s32.totalorder %s14, 0
    %p35 = por %p33, %p34
    %p36 = scmp.ne.s32.totalorder %s22, %s23
    %p37 = scmp.eq.s32.totalorder %s15, 1
    %p38 = por %p36, %p37
    %p40 = scmp.ne.s32.totalorder %s23, %s39
    %p41 = scmp.eq.s32.totalorder %s15, 0
    %p42 = por %p40, %p41
    %s44 = sadd.s32 %s43, 1
    %p47 = scmp.eq.s32.totalorder %s9, 1
    %p48 = scmp.ne.s32.totalorder %s43, %s45
    %p49 = scmp.eq.s32.totalorder %s9, 0
    %p50 = por %p48, %p49
    %p51 = scmp.ne.s32.totalorder %s43, %s45
    %p52 = scmp.eq.s32.totalorder %s14, 1
    %p53 = por %p51, %p52
    %p54 = scmp.ne.s32.totalorder %s45, %s46
    %p55 = scmp.eq.s32.totalorder %s14, 0
    %p56 = por %p54, %p55
    %p57 = scmp.ne.s32.totalorder %s45, %s46
    %p58 = scmp.eq.s32.totalorder %s15, 1
    %p59 = por %p57, %p58
    %p61 = scmp.ne.s32.totalorder %s46, %s60
    %p62 = scmp.eq.s32.totalorder %s15, 0
    %p63 = por %p61, %p62
    %s65 = sadd.s32 %s64, 1
    %p68 = scmp.eq.s32.totalorder %s9, 1
    %p69 = scmp.ne.s32.totalorder %s64, %s66
    %p70 = scmp.eq.s32.totalorder %s9, 0
    %p71 = por %p69, %p70
    %p72 = scmp.ne.s32.totalorder %s64, %s66
    %p73 = scmp.eq.s32.totalorder %s14, 1
    %p74 = por %p72, %p73
    %p75 = scmp.ne.s32.totalorder %s66, %s67
    %p76 = scmp.eq.s32.totalorder %s14, 0
    %p77 = por %p75, %p76
    %p78 = scmp.ne.s32.totalorder %s66, %s67
    %p79 = scmp.eq.s32.totalorder %s15, 1
    %p80 = por %p78, %p79
    %p82 = scmp.ne.s32.totalorder %s67, %s81
    %p83 = scmp.eq.s32.totalorder %s15, 0
    %p84 = por %p82, %p83
    %s85 = ssub.s32 %s9, %s16
    %p86 = scmp.eq.s32.totalorder %s85, 0
    %s88 = sadd.s32 %s87, 1
    %s89 = scalar_select %p86, %s87, %s88
    %p92 = pneg %p86
    %p93 = scmp.eq.s32.totalorder %s9, 1
    %p94 = por %p92, %p93
    %p95 = scmp.ne.s32.totalorder %s87, %s90
    %p96 = scmp.eq.s32.totalorder %s9, 0
    %p97 = por %p95, %p96
    %p98 = scmp.ne.s32.totalorder %s87, %s90
    %p99 = scmp.eq.s32.totalorder %s14, 1
    %p100 = por %p98, %p99
    %p101 = scmp.ne.s32.totalorder %s90, %s91
    %p102 = scmp.eq.s32.totalorder %s14, 0
    %p103 = por %p101, %p102
    %p104 = scmp.ne.s32.totalorder %s90, %s91
    %p105 = scmp.eq.s32.totalorder %s15, 1
    %p106 = por %p104, %p105
    %p108 = scmp.ne.s32.totalorder %s91, %s107
    %p109 = scmp.eq.s32.totalorder %s15, 0
    %p110 = por %p108, %p109
    %p111 = scmp.le.s32.totalorder 1, %s9
    %p112 = scmp.lt.s32.totalorder %s9, 3
    %p113 = pnand %p111, %p112
    %p114 = pneg %p113
    // Predicated region
    $region9: #{tpu_custom_call.1} parent=5 // pred_check
      _
    $region10: #{tpu_custom_call.1} parent=5 // pred_check_branch
      %116 = sbr.rel (%p113) target = $region12
    $region11: #{tpu_custom_call.1} parent=5 // pred_region
      %s117 = ssub.s32 %s9, 1
      // Predicated region
      $region13: #{tpu_custom_call.1} parent=11 // pred_check
        %p118 = pneg %p56
      $region14: #{tpu_custom_call.1} parent=11 // pred_check_branch
        %120 = sbr.rel (%p118) target = $region16
      $region15: #{tpu_custom_call.1} parent=11 // pred_region
        _
      $region16: #{tpu_custom_call.1} parent=11 // pred_fallthru
        _
      // Predicated region
      $region17: #{tpu_custom_call.1} parent=11 // pred_check
        %p121 = pneg %p77
      $region18: #{tpu_custom_call.1} parent=11 // pred_check_branch
        %123 = sbr.rel (%p121) target = $region20
      $region19: #{tpu_custom_call.1} parent=11 // pred_region
        _
      $region20: #{tpu_custom_call.1} parent=11 // pred_fallthru
        _
    $region12: #{tpu_custom_call.1} parent=5 // pred_fallthru
      _
    %p124 = scmp.lt.s32.totalorder %s9, 2
    // Predicated region
    $region21: #{tpu_custom_call.1} parent=5 // pred_check
      %p125 = pneg %p124
    $region22: #{tpu_custom_call.1} parent=5 // pred_check_branch
      %127 = sbr.rel (%p125) target = $region24
    $region23: #{tpu_custom_call.1} parent=5 // pred_region
      // Predicated region
      $region25: #{tpu_custom_call.1} parent=23 // pred_check
        %p128 = pneg %p29
      $region26: #{tpu_custom_call.1} parent=23 // pred_check_branch
        %130 = sbr.rel (%p128) target = $region28
      $region27: #{tpu_custom_call.1} parent=23 // pred_region
        %s131 = smul.u32 32, %s9
        %p132 = scmp.lt.s32.totalorder %s131, 63
        %s133 = scalar_select %p132, %s131, 63
        %s134 = smul.addr %s133, 8
        %s135 = scalar_lea.vmem %s0, %s134
        %s136 = smul.u32 32, %s9
      $region28: #{tpu_custom_call.1} parent=23 // pred_fallthru
        _
    $region24: #{tpu_custom_call.1} parent=5 // pred_fallthru
      _
    %p137 = scmp.le.s32.totalorder 1, %s9
    %p138 = scmp.lt.s32.totalorder %s9, 3
    %p139 = pnand %p137, %p138
    %p140 = pneg %p139
    // Predicated region
    $region29: #{tpu_custom_call.1} parent=5 // pred_check
      _
    $region30: #{tpu_custom_call.1} parent=5 // pred_check_branch
      %142 = sbr.rel (%p139) target = $region32
    $region31: #{tpu_custom_call.1} parent=5 // pred_region
      %s143 = ssub.s32 %s9, 1
      %s144 = smul.u32 32, %s14
      %p145 = scmp.lt.s32.totalorder %s144, 63
      %s146 = scalar_select %p145, %s144, 63
      %s147 = smul.addr %s146, 8
      %s148 = scalar_lea.vmem %s0, %s147
      %p149 = pneg %p35
      %p150 = pneg %p32
      %p151 = pneg %p56
      %p152 = pneg %p53
      %p153 = pneg %p77
      %p154 = pneg %p74
      %p155 = pneg %p103
      %p156 = pneg %p100
      %s157 = smul.u32 32, %s14
      %p158 = scmp.lt.s32.totalorder %s157, 63
      %s159 = scalar_select %p158, %s157, 63
      %s160 = smul.addr %s159, 8
      %s161 = scalar_lea.vmem %s3, %s160
      %s162 = smul.u32 32, %s14
      %p163 = scmp.lt.s32.totalorder %s162, 63
      %s164 = scalar_select %p163, %s162, 63
      %s165 = smul.addr %s164, 8
      %s166 = scalar_lea.vmem %s0, %s165
      %s167 = smul.u32 32, %s14
      %s168 = smul.u32 32, %s14
      %p169 = scmp.lt.s32.totalorder %s168, 63
      %s170 = scalar_select %p169, %s168, 63
      %s171 = smul.addr %s170, 8
      %s172 = scalar_lea.vmem %s3, %s171
      %s173 = smul.u32 32, %s14
      %v176 = vld [vmem:[%s166] sm:$0xff]
      %v177 = vld [vmem:[%s166 + $0x8] sm:$0xff]
      %v178 = vld [vmem:[%s166 + $0x10] sm:$0xff]
      %v179 = vld [vmem:[%s166 + $0x18] sm:$0xff]
      %v180 = vld [vmem:[%s166 + $0x20] sm:$0xff]
      %v181 = vld [vmem:[%s166 + $0x28] sm:$0xff]
      %v182 = vld [vmem:[%s166 + $0x30] sm:$0xff]
      %v183 = vld [vmem:[%s166 + $0x38] sm:$0xff]
      %v184 = vld [vmem:[%s166 + $0x40] sm:$0xff]
      %v185 = vld [vmem:[%s166 + $0x48] sm:$0xff]
      %v186 = vld [vmem:[%s166 + $0x50] sm:$0xff]
      %v187 = vld [vmem:[%s166 + $0x58] sm:$0xff]
      %v188 = vld [vmem:[%s166 + $0x60] sm:$0xff]
      %v189 = vld [vmem:[%s166 + $0x68] sm:$0xff]
      %v190 = vld [vmem:[%s166 + $0x70] sm:$0xff]
      %v191 = vld [vmem:[%s166 + $0x78] sm:$0xff]
      %v192 = vld [vmem:[%s166 + $0x80] sm:$0xff]
      %v193 = vld [vmem:[%s166 + $0x88] sm:$0xff]
      %v194 = vld [vmem:[%s166 + $0x90] sm:$0xff]
      %v195 = vld [vmem:[%s166 + $0x98] sm:$0xff]
      %v196 = vld [vmem:[%s166 + $0xa0] sm:$0xff]
      %v197 = vld [vmem:[%s166 + $0xa8] sm:$0xff]
      %v198 = vld [vmem:[%s166 + $0xb0] sm:$0xff]
      %v199 = vld [vmem:[%s166 + $0xb8] sm:$0xff]
      %v200 = vld [vmem:[%s166 + $0xc0] sm:$0xff]
      %v201 = vld [vmem:[%s166 + $0xc8] sm:$0xff]
      %v202 = vld [vmem:[%s166 + $0xd0] sm:$0xff]
      %v203 = vld [vmem:[%s166 + $0xd8] sm:$0xff]
      %v204 = vld [vmem:[%s166 + $0xe0] sm:$0xff]
      %v205 = vld [vmem:[%s166 + $0xe8] sm:$0xff]
      %v206 = vld [vmem:[%s166 + $0xf0] sm:$0xff]
      %v207 = vld [vmem:[%s166 + $0xf8] sm:$0xff]
      %v208 = vpack.c.bf16 %v177, %v176
      %v209 = vpack.c.bf16 %v179, %v178
      %v210 = vpack.c.bf16 %v181, %v180
      %v211 = vpack.c.bf16 %v183, %v182
      %v212 = vpack.c.bf16 %v185, %v184
      %v213 = vpack.c.bf16 %v187, %v186
      %v214 = vpack.c.bf16 %v189, %v188
      %v215 = vpack.c.bf16 %v191, %v190
      %v216 = vpack.c.bf16 %v193, %v192
      %v217 = vpack.c.bf16 %v195, %v194
      %v218 = vpack.c.bf16 %v197, %v196
      %v219 = vpack.c.bf16 %v199, %v198
      %v220 = vpack.c.bf16 %v201, %v200
      %v221 = vpack.c.bf16 %v203, %v202
      %v222 = vpack.c.bf16 %v205, %v204
      %v223 = vpack.c.bf16 %v207, %v206
      %v224 = vld [vmem:[%s1] sm:$0xf]
      %vm225 = vcmask 64512
      %v227 = vsel %vm225, %v208, 0
      %v230 = vsel %vm225, %v209, 0
      %v233 = vsel %vm225, %v210, 0
      %v236 = vsel %vm225, %v211, 0
      %v239 = vsel %vm225, %v212, 0
      %v242 = vsel %vm225, %v213, 0
      %v245 = vsel %vm225, %v214, 0
      %v248 = vsel %vm225, %v215, 0
      %v251 = vsel %vm225, %v216, 0
      %v254 = vsel %vm225, %v217, 0
      %v257 = vsel %vm225, %v218, 0
      %v260 = vsel %vm225, %v219, 0
      %v263 = vsel %vm225, %v220, 0
      %v266 = vsel %vm225, %v221, 0
      %v269 = vsel %vm225, %v222, 0
      %v272 = vsel %vm225, %v223, 0
      %vm274 = vcmask 1043456
      %v276 = vsel %vm274, %v224, 0
      %278 = vmatprep.subr.bf16.mxu0 0
      %279 = vmatpush1.bf16.msra.mxu0 0
      %280 = vmatprep.subr.bf16.mxu0 0
      %281 = vmatpush1.bf16.msra.mxu0 0
      %282 = vmatprep.subr.bf16.mxu0 0
      %283 = vmatpush1.bf16.msra.mxu0 0
      %284 = vmatprep.subr.bf16.mxu0 0
      %285 = vmatpush1.bf16.msra.mxu0 0
      %286 = vmatprep.subr.bf16.mxu0 0
      %287 = vmatpush1.bf16.msra.mxu0 0
      %288 = vmatprep.subr.bf16.mxu0 0
      %289 = vmatpush1.bf16.msra.mxu0 0
      %290 = vmatprep.subr.bf16.mxu0 0
      %291 = vmatpush1.bf16.msra.mxu0 0
      %292 = vmatprep.subr.bf16.mxu0 0
      %293 = vmatpush1.bf16.msra.mxu0 %v276
      %294 = vmatprep.subr.bf16.mxu0 0
      %295 = vmatpush2.bf16.msra.mxu0 0
      %296 = vmatprep.subr.bf16.mxu0 0
      %297 = vmatpush2.bf16.msra.mxu0 0
      %298 = vmatprep.subr.bf16.mxu0 0
      %299 = vmatpush2.bf16.msra.mxu0 0
      %300 = vmatprep.subr.bf16.mxu0 0
      %301 = vmatpush2.bf16.msra.mxu0 0
      %302 = vmatprep.subr.bf16.mxu0 0
      %303 = vmatpush2.bf16.msra.mxu0 0
      %304 = vmatprep.subr.bf16.mxu0 0
      %305 = vmatpush2.bf16.msra.mxu0 0
      %306 = vmatprep.subr.bf16.mxu0 0
      %307 = vmatpush2.bf16.msra.mxu0 0
      %308 = vmatprep.subr.bf16.mxu0 0
      %309 = vmatpush2.bf16.msra.mxu0 0
      %310 = vmatprep.mubr.bf16.mxu0 0
      %311 = vmatmul.mubr.bf16.gmra.mxu0 %v227
      %v312 = vpop.f32.mrf.mxu0
      %v313 = vadd.f32 0.0, %v312
      %v314 = vpop.f32.mrf.mxu0
      %v315 = vpop.f32.mrf.mxu0
      %v316 = vadd.f32 0.0, %v315
      %v317 = vpop.f32.mrf.mxu0
      %318 = vmatprep.mubr.bf16.mxu0 0
      %319 = vmatmul.mubr.bf16.gmra.mxu0 %v230
      %v320 = vpop.f32.mrf.mxu0
      %v321 = vadd.f32 0.0, %v320
      %v322 = vpop.f32.mrf.mxu0
      %v323 = vpop.f32.mrf.mxu0
      %v324 = vadd.f32 0.0, %v323
      %v325 = vpop.f32.mrf.mxu0
      %326 = vmatprep.mubr.bf16.mxu0 0
      %327 = vmatmul.mubr.bf16.gmra.mxu0 %v233
      %v328 = vpop.f32.mrf.mxu0
      %v329 = vadd.f32 0.0, %v328
      %v330 = vpop.f32.mrf.mxu0
      %v331 = vpop.f32.mrf.mxu0
      %v332 = vadd.f32 0.0, %v331
      %v333 = vpop.f32.mrf.mxu0
      %334 = vmatprep.mubr.bf16.mxu0 0
      %335 = vmatmul.mubr.bf16.gmra.mxu0 %v236
      %v336 = vpop.f32.mrf.mxu0
      %v337 = vadd.f32 0.0, %v336
      %v338 = vpop.f32.mrf.mxu0
      %v339 = vpop.f32.mrf.mxu0
      %v340 = vadd.f32 0.0, %v339
      %v341 = vpop.f32.mrf.mxu0
      %342 = vmatprep.mubr.bf16.mxu0 0
      %343 = vmatmul.mubr.bf16.gmra.mxu0 %v239
      %v344 = vpop.f32.mrf.mxu0
      %v345 = vadd.f32 0.0, %v344
      %v346 = vpop.f32.mrf.mxu0
      %v347 = vpop.f32.mrf.mxu0
      %v348 = vadd.f32 0.0, %v347
      %v349 = vpop.f32.mrf.mxu0
      %350 = vmatprep.mubr.bf16.mxu0 0
      %351 = vmatmul.mubr.bf16.gmra.mxu0 %v242
      %v352 = vpop.f32.mrf.mxu0
      %v353 = vadd.f32 0.0, %v352
      %v354 = vpop.f32.mrf.mxu0
      %v355 = vpop.f32.mrf.mxu0
      %v356 = vadd.f32 0.0, %v355
      %v357 = vpop.f32.mrf.mxu0
      %358 = vmatprep.mubr.bf16.mxu0 0
      %359 = vmatmul.mubr.bf16.gmra.mxu0 %v245
      %v360 = vpop.f32.mrf.mxu0
      %v361 = vadd.f32 0.0, %v360
      %v362 = vpop.f32.mrf.mxu0
      %v363 = vpop.f32.mrf.mxu0
      %v364 = vadd.f32 0.0, %v363
      %v365 = vpop.f32.mrf.mxu0
      %366 = vmatprep.mubr.bf16.mxu0 0
      %367 = vmatmul.mubr.bf16.gmra.mxu0 %v248
      %v368 = vpop.f32.mrf.mxu0
      %v369 = vadd.f32 0.0, %v368
      %v370 = vpop.f32.mrf.mxu0
      %v371 = vpop.f32.mrf.mxu0
      %v372 = vadd.f32 0.0, %v371
      %v373 = vpop.f32.mrf.mxu0
      %374 = vmatprep.mubr.bf16.mxu0 0
      %375 = vmatmul.mubr.bf16.gmra.mxu0 %v251
      %v376 = vpop.f32.mrf.mxu0
      %v377 = vadd.f32 0.0, %v376
      %v378 = vpop.f32.mrf.mxu0
      %v379 = vpop.f32.mrf.mxu0
      %v380 = vadd.f32 0.0, %v379
      %v381 = vpop.f32.mrf.mxu0
      %382 = vmatprep.mubr.bf16.mxu0 0
      %383 = vmatmul.mubr.bf16.gmra.mxu0 %v254
      %v384 = vpop.f32.mrf.mxu0
      %v385 = vadd.f32 0.0, %v384
      %v386 = vpop.f32.mrf.mxu0
      %v387 = vpop.f32.mrf.mxu0
      %v388 = vadd.f32 0.0, %v387
      %v389 = vpop.f32.mrf.mxu0
      %390 = vmatprep.mubr.bf16.mxu0 0
      %391 = vmatmul.mubr.bf16.gmra.mxu0 %v257
      %v392 = vpop.f32.mrf.mxu0
      %v393 = vadd.f32 0.0, %v392
      %v394 = vpop.f32.mrf.mxu0
      %v395 = vpop.f32.mrf.mxu0
      %v396 = vadd.f32 0.0, %v395
      %v397 = vpop.f32.mrf.mxu0
      %398 = vmatprep.mubr.bf16.mxu0 0
      %399 = vmatmul.mubr.bf16.gmra.mxu0 %v260
      %v400 = vpop.f32.mrf.mxu0
      %v401 = vadd.f32 0.0, %v400
      %v402 = vpop.f32.mrf.mxu0
      %v403 = vpop.f32.mrf.mxu0
      %v404 = vadd.f32 0.0, %v403
      %v405 = vpop.f32.mrf.mxu0
      %406 = vmatprep.mubr.bf16.mxu0 0
      %407 = vmatmul.mubr.bf16.gmra.mxu0 %v263
      %v408 = vpop.f32.mrf.mxu0
      %v409 = vadd.f32 0.0, %v408
      %v410 = vpop.f32.mrf.mxu0
      %v411 = vpop.f32.mrf.mxu0
      %v412 = vadd.f32 0.0, %v411
      %v413 = vpop.f32.mrf.mxu0
      %414 = vmatprep.mubr.bf16.mxu0 0
      %415 = vmatmul.mubr.bf16.gmra.mxu0 %v266
      %v416 = vpop.f32.mrf.mxu0
      %v417 = vadd.f32 0.0, %v416
      %v418 = vpop.f32.mrf.mxu0
      %v419 = vpop.f32.mrf.mxu0
      %v420 = vadd.f32 0.0, %v419
      %v421 = vpop.f32.mrf.mxu0
      %422 = vmatprep.mubr.bf16.mxu0 0
      %423 = vmatmul.mubr.bf16.gmra.mxu0 %v269
      %v424 = vpop.f32.mrf.mxu0
      %v425 = vadd.f32 0.0, %v424
      %v426 = vpop.f32.mrf.mxu0
      %v427 = vpop.f32.mrf.mxu0
      %v428 = vadd.f32 0.0, %v427
      %v429 = vpop.f32.mrf.mxu0
      %430 = vmatprep.mubr.bf16.mxu0 0
      %431 = vmatmul.mubr.bf16.gmra.mxu0 %v272
      %v432 = vpop.f32.mrf.mxu0
      %v433 = vadd.f32 0.0, %v432
      %v434 = vpop.f32.mrf.mxu0
      %v435 = vpop.f32.mrf.mxu0
      %v436 = vadd.f32 0.0, %v435
      %v437 = vpop.f32.mrf.mxu0
      %438 = vdwg.mxu0
      %v439 = vpack.c.bf16 %v316, %v313
      %v440 = vpack.c.bf16 %v324, %v321
      %v441 = vpack.c.bf16 %v332, %v329
      %v442 = vpack.c.bf16 %v340, %v337
      %v443 = vpack.c.bf16 %v348, %v345
      %v444 = vpack.c.bf16 %v356, %v353
      %v445 = vpack.c.bf16 %v364, %v361
      %v446 = vpack.c.bf16 %v372, %v369
      %v447 = vpack.c.bf16 %v380, %v377
      %v448 = vpack.c.bf16 %v388, %v385
      %v449 = vpack.c.bf16 %v396, %v393
      %v450 = vpack.c.bf16 %v404, %v401
      %v451 = vpack.c.bf16 %v412, %v409
      %v452 = vpack.c.bf16 %v420, %v417
      %v453 = vpack.c.bf16 %v428, %v425
      %v454 = vpack.c.bf16 %v436, %v433
      %v455 = vld [vmem:[%s2] sm:$0x1]
      %v456 = vpack.c.bf16 %v455, %v455
      %v458 = vpack.i.b16 %v456, %v456
      %v460 = vlaneseq
      %v461 = vshrl.u32 %v460, 7
      %v462 = vsub.s32 0, %v461
      %v463 = vrot.slane %v458, %v462
      %v464 = vadd.bf16 %v439, %v463
      %v465 = vadd.bf16 %v440, %v463
      %v466 = vadd.bf16 %v441, %v463
      %v467 = vadd.bf16 %v442, %v463
      %v468 = vadd.bf16 %v443, %v463
      %v469 = vadd.bf16 %v444, %v463
      %v470 = vadd.bf16 %v445, %v463
      %v471 = vadd.bf16 %v446, %v463
      %v472 = vadd.bf16 %v447, %v463
      %v473 = vadd.bf16 %v448, %v463
      %v474 = vadd.bf16 %v449, %v463
      %v475 = vadd.bf16 %v450, %v463
      %v476 = vadd.bf16 %v451, %v463
      %v477 = vadd.bf16 %v452, %v463
      %v478 = vadd.bf16 %v453, %v463
      %v479 = vadd.bf16 %v454, %v463
      %v480 = vmul.bf16 %v464, 1009007652
      %v481 = vmul.bf16 %v465, 1009007652
      %v482 = vmul.bf16 %v466, 1009007652
      %v483 = vmul.bf16 %v467, 1009007652
      %v484 = vmul.bf16 %v468, 1009007652
      %v485 = vmul.bf16 %v469, 1009007652
      %v486 = vmul.bf16 %v470, 1009007652
      %v487 = vmul.bf16 %v471, 1009007652
      %v488 = vmul.bf16 %v472, 1009007652
      %v489 = vmul.bf16 %v473, 1009007652
      %v490 = vmul.bf16 %v474, 1009007652
      %v491 = vmul.bf16 %v475, 1009007652
      %v492 = vmul.bf16 %v476, 1009007652
      %v493 = vmul.bf16 %v477, 1009007652
      %v494 = vmul.bf16 %v478, 1009007652
      %v495 = vmul.bf16 %v479, 1009007652
      %v496 = vmax.bf16 %v464, %v480
      %v497 = vmax.bf16 %v465, %v481
      %v498 = vmax.bf16 %v466, %v482
      %v499 = vmax.bf16 %v467, %v483
      %v500 = vmax.bf16 %v468, %v484
      %v501 = vmax.bf16 %v469, %v485
      %v502 = vmax.bf16 %v470, %v486
      %v503 = vmax.bf16 %v471, %v487
      %v504 = vmax.bf16 %v472, %v488
      %v505 = vmax.bf16 %v473, %v489
      %v506 = vmax.bf16 %v474, %v490
      %v507 = vmax.bf16 %v475, %v491
      %v508 = vmax.bf16 %v476, %v492
      %v509 = vmax.bf16 %v477, %v493
      %v510 = vmax.bf16 %v478, %v494
      %v511 = vmax.bf16 %v479, %v495
      %v512 = vld [vmem:[%s1 + $0x8] sm:$0xf]
      %v513 = vld [vmem:[%s1 + $0xc] sm:$0xf]
      %v514 = vld [vmem:[%s1 + $0x10] sm:$0xf]
      %v515 = vld [vmem:[%s1 + $0x14] sm:$0xf]
      %v516 = vld [vmem:[%s1 + $0x18] sm:$0xf]
      %v517 = vld [vmem:[%s1 + $0x1c] sm:$0xf]
      %v518 = vld [vmem:[%s1 + $0x20] sm:$0xf]
      %v519 = vld [vmem:[%s1 + $0x24] sm:$0xf]
      %v520 = vld [vmem:[%s1 + $0x28] sm:$0xf]
      %v521 = vld [vmem:[%s1 + $0x2c] sm:$0xf]
      %v522 = vld [vmem:[%s1 + $0x30] sm:$0xf]
      %v523 = vld [vmem:[%s1 + $0x34] sm:$0xf]
      %v524 = vld [vmem:[%s1 + $0x38] sm:$0xf]
      %v525 = vld [vmem:[%s1 + $0x3c] sm:$0xf]
      %v526 = vld [vmem:[%s1 + $0x40] sm:$0xf]
      %v527 = vld [vmem:[%s1 + $0x44] sm:$0xf]
      %v544 = vunpack.c.l.b16 %v512
      %v545 = vunpack.c.l.b16 %v513
      %v546 = vunpack.c.l.b16 %v514
      %v547 = vunpack.c.l.b16 %v515
      %v548 = vunpack.c.l.b16 %v516
      %v549 = vunpack.c.l.b16 %v517
      %v550 = vunpack.c.l.b16 %v518
      %v551 = vunpack.c.l.b16 %v519
      %v552 = vunpack.c.l.b16 %v520
      %v553 = vunpack.c.l.b16 %v521
      %v554 = vunpack.c.l.b16 %v522
      %v555 = vunpack.c.l.b16 %v523
      %v556 = vunpack.c.l.b16 %v524
      %v557 = vunpack.c.l.b16 %v525
      %v558 = vunpack.c.l.b16 %v526
      %v559 = vunpack.c.l.b16 %v527
      %v560 = vpack.c.b16 %v545, %v544
      %v561 = vpack.c.b16 %v547, %v546
      %v562 = vpack.c.b16 %v549, %v548
      %v563 = vpack.c.b16 %v551, %v550
      %v564 = vpack.c.b16 %v553, %v552
      %v565 = vpack.c.b16 %v555, %v554
      %v566 = vpack.c.b16 %v557, %v556
      %v567 = vpack.c.b16 %v559, %v558
      %576 = vmatprep.subr.bf16.mxu0 0
      %577 = vmatpush1.bf16.msra.mxu0 %v567
      %578 = vmatprep.subr.bf16.mxu0 0
      %579 = vmatpush1.bf16.msra.mxu0 %v566
      %580 = vmatprep.subr.bf16.mxu0 0
      %581 = vmatpush1.bf16.msra.mxu0 %v565
      %582 = vmatprep.subr.bf16.mxu0 0
      %583 = vmatpush1.bf16.msra.mxu0 %v564
      %584 = vmatprep.subr.bf16.mxu0 0
      %585 = vmatpush1.bf16.msra.mxu0 %v563
      %586 = vmatprep.subr.bf16.mxu0 0
      %587 = vmatpush1.bf16.msra.mxu0 %v562
      %588 = vmatprep.subr.bf16.mxu0 0
      %589 = vmatpush1.bf16.msra.mxu0 %v561
      %590 = vmatprep.subr.bf16.mxu0 0
      %591 = vmatpush1.bf16.msra.mxu0 %v560
      %592 = vmatprep.subr.bf16.mxu0 0
      %593 = vmatpush2.bf16.msra.mxu0 0
      %594 = vmatprep.subr.bf16.mxu0 0
      %595 = vmatpush2.bf16.msra.mxu0 0
      %596 = vmatprep.subr.bf16.mxu0 0
      %597 = vmatpush2.bf16.msra.mxu0 0
      %598 = vmatprep.subr.bf16.mxu0 0
      %599 = vmatpush2.bf16.msra.mxu0 0
      %600 = vmatprep.subr.bf16.mxu0 0
      %601 = vmatpush2.bf16.msra.mxu0 0
      %602 = vmatprep.subr.bf16.mxu0 0
      %603 = vmatpush2.bf16.msra.mxu0 0
      %604 = vmatprep.subr.bf16.mxu0 0
      %605 = vmatpush2.bf16.msra.mxu0 0
      %606 = vmatprep.subr.bf16.mxu0 0
      %607 = vmatpush2.bf16.msra.mxu0 0
      %608 = vmatprep.mubr.bf16.mxu0 0
      %609 = vmatmul.mubr.bf16.gmra.mxu0 %v496
      %v610 = vpop.f32.mrf.mxu0
      %v611 = vadd.f32 0.0, %v610
      %v612 = vpop.f32.mrf.mxu0
      %v613 = vpop.f32.mrf.mxu0
      %v614 = vadd.f32 0.0, %v613
      %v615 = vpop.f32.mrf.mxu0
      %616 = vmatprep.mubr.bf16.mxu0 0
      %617 = vmatmul.mubr.bf16.gmra.mxu0 %v497
      %v618 = vpop.f32.mrf.mxu0
      %v619 = vadd.f32 0.0, %v618
      %v620 = vpop.f32.mrf.mxu0
      %v621 = vpop.f32.mrf.mxu0
      %v622 = vadd.f32 0.0, %v621
      %v623 = vpop.f32.mrf.mxu0
      %624 = vmatprep.mubr.bf16.mxu0 0
      %625 = vmatmul.mubr.bf16.gmra.mxu0 %v498
      %v626 = vpop.f32.mrf.mxu0
      %v627 = vadd.f32 0.0, %v626
      %v628 = vpop.f32.mrf.mxu0
      %v629 = vpop.f32.mrf.mxu0
      %v630 = vadd.f32 0.0, %v629
      %v631 = vpop.f32.mrf.mxu0
      %632 = vmatprep.mubr.bf16.mxu0 0
      %633 = vmatmul.mubr.bf16.gmra.mxu0 %v499
      %v634 = vpop.f32.mrf.mxu0
      %v635 = vadd.f32 0.0, %v634
      %v636 = vpop.f32.mrf.mxu0
      %v637 = vpop.f32.mrf.mxu0
      %v638 = vadd.f32 0.0, %v637
      %v639 = vpop.f32.mrf.mxu0
      %640 = vmatprep.mubr.bf16.mxu0 0
      %641 = vmatmul.mubr.bf16.gmra.mxu0 %v500
      %v642 = vpop.f32.mrf.mxu0
      %v643 = vadd.f32 0.0, %v642
      %v644 = vpop.f32.mrf.mxu0
      %v645 = vpop.f32.mrf.mxu0
      %v646 = vadd.f32 0.0, %v645
      %v647 = vpop.f32.mrf.mxu0
      %648 = vmatprep.mubr.bf16.mxu0 0
      %649 = vmatmul.mubr.bf16.gmra.mxu0 %v501
      %v650 = vpop.f32.mrf.mxu0
      %v651 = vadd.f32 0.0, %v650
      %v652 = vpop.f32.mrf.mxu0
      %v653 = vpop.f32.mrf.mxu0
      %v654 = vadd.f32 0.0, %v653
      %v655 = vpop.f32.mrf.mxu0
      %656 = vmatprep.mubr.bf16.mxu0 0
      %657 = vmatmul.mubr.bf16.gmra.mxu0 %v502
      %v658 = vpop.f32.mrf.mxu0
      %v659 = vadd.f32 0.0, %v658
      %v660 = vpop.f32.mrf.mxu0
      %v661 = vpop.f32.mrf.mxu0
      %v662 = vadd.f32 0.0, %v661
      %v663 = vpop.f32.mrf.mxu0
      %664 = vmatprep.mubr.bf16.mxu0 0
      %665 = vmatmul.mubr.bf16.gmra.mxu0 %v503
      %v666 = vpop.f32.mrf.mxu0
      %v667 = vadd.f32 0.0, %v666
      %v668 = vpop.f32.mrf.mxu0
      %v669 = vpop.f32.mrf.mxu0
      %v670 = vadd.f32 0.0, %v669
      %v671 = vpop.f32.mrf.mxu0
      %672 = vmatprep.mubr.bf16.mxu0 0
      %673 = vmatmul.mubr.bf16.gmra.mxu0 %v504
      %v674 = vpop.f32.mrf.mxu0
      %v675 = vadd.f32 0.0, %v674
      %v676 = vpop.f32.mrf.mxu0
      %v677 = vpop.f32.mrf.mxu0
      %v678 = vadd.f32 0.0, %v677
      %v679 = vpop.f32.mrf.mxu0
      %680 = vmatprep.mubr.bf16.mxu0 0
      %681 = vmatmul.mubr.bf16.gmra.mxu0 %v505
      %v682 = vpop.f32.mrf.mxu0
      %v683 = vadd.f32 0.0, %v682
      %v684 = vpop.f32.mrf.mxu0
      %v685 = vpop.f32.mrf.mxu0
      %v686 = vadd.f32 0.0, %v685
      %v687 = vpop.f32.mrf.mxu0
      %688 = vmatprep.mubr.bf16.mxu0 0
      %689 = vmatmul.mubr.bf16.gmra.mxu0 %v506
      %v690 = vpop.f32.mrf.mxu0
      %v691 = vadd.f32 0.0, %v690
      %v692 = vpop.f32.mrf.mxu0
      %v693 = vpop.f32.mrf.mxu0
      %v694 = vadd.f32 0.0, %v693
      %v695 = vpop.f32.mrf.mxu0
      %696 = vmatprep.mubr.bf16.mxu0 0
      %697 = vmatmul.mubr.bf16.gmra.mxu0 %v507
      %v698 = vpop.f32.mrf.mxu0
      %v699 = vadd.f32 0.0, %v698
      %v700 = vpop.f32.mrf.mxu0
      %v701 = vpop.f32.mrf.mxu0
      %v702 = vadd.f32 0.0, %v701
      %v703 = vpop.f32.mrf.mxu0
      %704 = vmatprep.mubr.bf16.mxu0 0
      %705 = vmatmul.mubr.bf16.gmra.mxu0 %v508
      %v706 = vpop.f32.mrf.mxu0
      %v707 = vadd.f32 0.0, %v706
      %v708 = vpop.f32.mrf.mxu0
      %v709 = vpop.f32.mrf.mxu0
      %v710 = vadd.f32 0.0, %v709
      %v711 = vpop.f32.mrf.mxu0
      %712 = vmatprep.mubr.bf16.mxu0 0
      %713 = vmatmul.mubr.bf16.gmra.mxu0 %v509
      %v714 = vpop.f32.mrf.mxu0
      %v715 = vadd.f32 0.0, %v714
      %v716 = vpop.f32.mrf.mxu0
      %v717 = vpop.f32.mrf.mxu0
      %v718 = vadd.f32 0.0, %v717
      %v719 = vpop.f32.mrf.mxu0
      %720 = vmatprep.mubr.bf16.mxu0 0
      %721 = vmatmul.mubr.bf16.gmra.mxu0 %v510
      %v722 = vpop.f32.mrf.mxu0
      %v723 = vadd.f32 0.0, %v722
      %v724 = vpop.f32.mrf.mxu0
      %v725 = vpop.f32.mrf.mxu0
      %v726 = vadd.f32 0.0, %v725
      %v727 = vpop.f32.mrf.mxu0
      %728 = vmatprep.mubr.bf16.mxu0 0
      %729 = vmatmul.mubr.bf16.gmra.mxu0 %v511
      %v730 = vpop.f32.mrf.mxu0
      %v731 = vadd.f32 0.0, %v730
      %v732 = vpop.f32.mrf.mxu0
      %v733 = vpop.f32.mrf.mxu0
      %v734 = vadd.f32 0.0, %v733
      %v735 = vpop.f32.mrf.mxu0
      %736 = vdwg.mxu0
      %v737 = vpack.c.bf16 %v614, %v611
      %v738 = vpack.c.bf16 %v622, %v619
      %v739 = vpack.c.bf16 %v630, %v627
      %v740 = vpack.c.bf16 %v638, %v635
      %v741 = vpack.c.bf16 %v646, %v643
      %v742 = vpack.c.bf16 %v654, %v651
      %v743 = vpack.c.bf16 %v662, %v659
      %v744 = vpack.c.bf16 %v670, %v667
      %v745 = vpack.c.bf16 %v678, %v675
      %v746 = vpack.c.bf16 %v686, %v683
      %v747 = vpack.c.bf16 %v694, %v691
      %v748 = vpack.c.bf16 %v702, %v699
      %v749 = vpack.c.bf16 %v710, %v707
      %v750 = vpack.c.bf16 %v718, %v715
      %v751 = vpack.c.bf16 %v726, %v723
      %v752 = vpack.c.bf16 %v734, %v731
      %v753 = vld [vmem:[%s2 + $0x1] sm:$0x1]
      %v754 = vpack.c.bf16 %v753, %v753
      %v756 = vpack.i.b16 %v754, %v754
      %v758 = vlaneseq
      %v759 = vshrl.u32 %v758, 7
      %v760 = vsub.s32 0, %v759
      %v761 = vrot.slane %v756, %v760
      %v762 = vadd.bf16 %v737, %v761
      %v763 = vadd.bf16 %v738, %v761
      %v764 = vadd.bf16 %v739, %v761
      %v765 = vadd.bf16 %v740, %v761
      %v766 = vadd.bf16 %v741, %v761
      %v767 = vadd.bf16 %v742, %v761
      %v768 = vadd.bf16 %v743, %v761
      %v769 = vadd.bf16 %v744, %v761
      %v770 = vadd.bf16 %v745, %v761
      %v771 = vadd.bf16 %v746, %v761
      %v772 = vadd.bf16 %v747, %v761
      %v773 = vadd.bf16 %v748, %v761
      %v774 = vadd.bf16 %v749, %v761
      %v775 = vadd.bf16 %v750, %v761
      %v776 = vadd.bf16 %v751, %v761
      %v777 = vadd.bf16 %v752, %v761
      %v778 = vmul.bf16 %v762, 1009007652
      %v779 = vmul.bf16 %v763, 1009007652
      %v780 = vmul.bf16 %v764, 1009007652
      %v781 = vmul.bf16 %v765, 1009007652
      %v782 = vmul.bf16 %v766, 1009007652
      %v783 = vmul.bf16 %v767, 1009007652
      %v784 = vmul.bf16 %v768, 1009007652
      %v785 = vmul.bf16 %v769, 1009007652
      %v786 = vmul.bf16 %v770, 1009007652
      %v787 = vmul.bf16 %v771, 1009007652
      %v788 = vmul.bf16 %v772, 1009007652
      %v789 = vmul.bf16 %v773, 1009007652
      %v790 = vmul.bf16 %v774, 1009007652
      %v791 = vmul.bf16 %v775, 1009007652
      %v792 = vmul.bf16 %v776, 1009007652
      %v793 = vmul.bf16 %v777, 1009007652
      %v794 = vmax.bf16 %v762, %v778
      %v795 = vmax.bf16 %v763, %v779
      %v796 = vmax.bf16 %v764, %v780
      %v797 = vmax.bf16 %v765, %v781
      %v798 = vmax.bf16 %v766, %v782
      %v799 = vmax.bf16 %v767, %v783
      %v800 = vmax.bf16 %v768, %v784
      %v801 = vmax.bf16 %v769, %v785
      %v802 = vmax.bf16 %v770, %v786
      %v803 = vmax.bf16 %v771, %v787
      %v804 = vmax.bf16 %v772, %v788
      %v805 = vmax.bf16 %v773, %v789
      %v806 = vmax.bf16 %v774, %v790
      %v807 = vmax.bf16 %v775, %v791
      %v808 = vmax.bf16 %v776, %v792
      %v809 = vmax.bf16 %v777, %v793
      %v810 = vld [vmem:[%s1 + $0x48] sm:$0xf]
      %v811 = vld [vmem:[%s1 + $0x4c] sm:$0xf]
      %v812 = vld [vmem:[%s1 + $0x50] sm:$0xf]
      %v813 = vld [vmem:[%s1 + $0x54] sm:$0xf]
      %v814 = vld [vmem:[%s1 + $0x58] sm:$0xf]
      %v815 = vld [vmem:[%s1 + $0x5c] sm:$0xf]
      %v816 = vld [vmem:[%s1 + $0x60] sm:$0xf]
      %v817 = vld [vmem:[%s1 + $0x64] sm:$0xf]
      %v818 = vld [vmem:[%s1 + $0x68] sm:$0xf]
      %v819 = vld [vmem:[%s1 + $0x6c] sm:$0xf]
      %v820 = vld [vmem:[%s1 + $0x70] sm:$0xf]
      %v821 = vld [vmem:[%s1 + $0x74] sm:$0xf]
      %v822 = vld [vmem:[%s1 + $0x78] sm:$0xf]
      %v823 = vld [vmem:[%s1 + $0x7c] sm:$0xf]
      %v824 = vld [vmem:[%s1 + $0x80] sm:$0xf]
      %v825 = vld [vmem:[%s1 + $0x84] sm:$0xf]
      %v842 = vunpack.c.l.b16 %v810
      %v843 = vunpack.c.l.b16 %v811
      %v844 = vunpack.c.l.b16 %v812
      %v845 = vunpack.c.l.b16 %v813
      %v846 = vunpack.c.l.b16 %v814
      %v847 = vunpack.c.l.b16 %v815
      %v848 = vunpack.c.l.b16 %v816
      %v849 = vunpack.c.l.b16 %v817
      %v850 = vunpack.c.l.b16 %v818
      %v851 = vunpack.c.l.b16 %v819
      %v852 = vunpack.c.l.b16 %v820
      %v853 = vunpack.c.l.b16 %v821
      %v854 = vunpack.c.l.b16 %v822
      %v855 = vunpack.c.l.b16 %v823
      %v856 = vunpack.c.l.b16 %v824
      %v857 = vunpack.c.l.b16 %v825
      %v858 = vpack.c.b16 %v843, %v842
      %v859 = vpack.c.b16 %v845, %v844
      %v860 = vpack.c.b16 %v847, %v846
      %v861 = vpack.c.b16 %v849, %v848
      %v862 = vpack.c.b16 %v851, %v850
      %v863 = vpack.c.b16 %v853, %v852
      %v864 = vpack.c.b16 %v855, %v854
      %v865 = vpack.c.b16 %v857, %v856
      %874 = vmatprep.subr.bf16.mxu0 0
      %875 = vmatpush1.bf16.msra.mxu0 %v865
      %876 = vmatprep.subr.bf16.mxu0 0
      %877 = vmatpush1.bf16.msra.mxu0 %v864
      %878 = vmatprep.subr.bf16.mxu0 0
      %879 = vmatpush1.bf16.msra.mxu0 %v863
      %880 = vmatprep.subr.bf16.mxu0 0
      %881 = vmatpush1.bf16.msra.mxu0 %v862
      %882 = vmatprep.subr.bf16.mxu0 0
      %883 = vmatpush1.bf16.msra.mxu0 %v861
      %884 = vmatprep.subr.bf16.mxu0 0
      %885 = vmatpush1.bf16.msra.mxu0 %v860
      %886 = vmatprep.subr.bf16.mxu0 0
      %887 = vmatpush1.bf16.msra.mxu0 %v859
      %888 = vmatprep.subr.bf16.mxu0 0
      %889 = vmatpush1.bf16.msra.mxu0 %v858
      %890 = vmatprep.subr.bf16.mxu0 0
      %891 = vmatpush2.bf16.msra.mxu0 0
      %892 = vmatprep.subr.bf16.mxu0 0
      %893 = vmatpush2.bf16.msra.mxu0 0
      %894 = vmatprep.subr.bf16.mxu0 0
      %895 = vmatpush2.bf16.msra.mxu0 0
      %896 = vmatprep.subr.bf16.mxu0 0
      %897 = vmatpush2.bf16.msra.mxu0 0
      %898 = vmatprep.subr.bf16.mxu0 0
      %899 = vmatpush2.bf16.msra.mxu0 0
      %900 = vmatprep.subr.bf16.mxu0 0
      %901 = vmatpush2.bf16.msra.mxu0 0
      %902 = vmatprep.subr.bf16.mxu0 0
      %903 = vmatpush2.bf16.msra.mxu0 0
      %904 = vmatprep.subr.bf16.mxu0 0
      %905 = vmatpush2.bf16.msra.mxu0 0
      %906 = vmatprep.mubr.bf16.mxu0 0
      %907 = vmatmul.mubr.bf16.gmra.mxu0 %v794
      %v908 = vpop.f32.mrf.mxu0
      %v909 = vadd.f32 0.0, %v908
      %v910 = vpop.f32.mrf.mxu0
      %v911 = vpop.f32.mrf.mxu0
      %v912 = vadd.f32 0.0, %v911
      %v913 = vpop.f32.mrf.mxu0
      %914 = vmatprep.mubr.bf16.mxu0 0
      %915 = vmatmul.mubr.bf16.gmra.mxu0 %v795
      %v916 = vpop.f32.mrf.mxu0
      %v917 = vadd.f32 0.0, %v916
      %v918 = vpop.f32.mrf.mxu0
      %v919 = vpop.f32.mrf.mxu0
      %v920 = vadd.f32 0.0, %v919
      %v921 = vpop.f32.mrf.mxu0
      %922 = vmatprep.mubr.bf16.mxu0 0
      %923 = vmatmul.mubr.bf16.gmra.mxu0 %v796
      %v924 = vpop.f32.mrf.mxu0
      %v925 = vadd.f32 0.0, %v924
      %v926 = vpop.f32.mrf.mxu0
      %v927 = vpop.f32.mrf.mxu0
      %v928 = vadd.f32 0.0, %v927
      %v929 = vpop.f32.mrf.mxu0
      %930 = vmatprep.mubr.bf16.mxu0 0
      %931 = vmatmul.mubr.bf16.gmra.mxu0 %v797
      %v932 = vpop.f32.mrf.mxu0
      %v933 = vadd.f32 0.0, %v932
      %v934 = vpop.f32.mrf.mxu0
      %v935 = vpop.f32.mrf.mxu0
      %v936 = vadd.f32 0.0, %v935
      %v937 = vpop.f32.mrf.mxu0
      %938 = vmatprep.mubr.bf16.mxu0 0
      %939 = vmatmul.mubr.bf16.gmra.mxu0 %v798
      %v940 = vpop.f32.mrf.mxu0
      %v941 = vadd.f32 0.0, %v940
      %v942 = vpop.f32.mrf.mxu0
      %v943 = vpop.f32.mrf.mxu0
      %v944 = vadd.f32 0.0, %v943
      %v945 = vpop.f32.mrf.mxu0
      %946 = vmatprep.mubr.bf16.mxu0 0
      %947 = vmatmul.mubr.bf16.gmra.mxu0 %v799
      %v948 = vpop.f32.mrf.mxu0
      %v949 = vadd.f32 0.0, %v948
      %v950 = vpop.f32.mrf.mxu0
      %v951 = vpop.f32.mrf.mxu0
      %v952 = vadd.f32 0.0, %v951
      %v953 = vpop.f32.mrf.mxu0
      %954 = vmatprep.mubr.bf16.mxu0 0
      %955 = vmatmul.mubr.bf16.gmra.mxu0 %v800
      %v956 = vpop.f32.mrf.mxu0
      %v957 = vadd.f32 0.0, %v956
      %v958 = vpop.f32.mrf.mxu0
      %v959 = vpop.f32.mrf.mxu0
      %v960 = vadd.f32 0.0, %v959
      %v961 = vpop.f32.mrf.mxu0
      %962 = vmatprep.mubr.bf16.mxu0 0
      %963 = vmatmul.mubr.bf16.gmra.mxu0 %v801
      %v964 = vpop.f32.mrf.mxu0
      %v965 = vadd.f32 0.0, %v964
      %v966 = vpop.f32.mrf.mxu0
      %v967 = vpop.f32.mrf.mxu0
      %v968 = vadd.f32 0.0, %v967
      %v969 = vpop.f32.mrf.mxu0
      %970 = vmatprep.mubr.bf16.mxu0 0
      %971 = vmatmul.mubr.bf16.gmra.mxu0 %v802
      %v972 = vpop.f32.mrf.mxu0
      %v973 = vadd.f32 0.0, %v972
      %v974 = vpop.f32.mrf.mxu0
      %v975 = vpop.f32.mrf.mxu0
      %v976 = vadd.f32 0.0, %v975
      %v977 = vpop.f32.mrf.mxu0
      %978 = vmatprep.mubr.bf16.mxu0 0
      %979 = vmatmul.mubr.bf16.gmra.mxu0 %v803
      %v980 = vpop.f32.mrf.mxu0
      %v981 = vadd.f32 0.0, %v980
      %v982 = vpop.f32.mrf.mxu0
      %v983 = vpop.f32.mrf.mxu0
      %v984 = vadd.f32 0.0, %v983
      %v985 = vpop.f32.mrf.mxu0
      %986 = vmatprep.mubr.bf16.mxu0 0
      %987 = vmatmul.mubr.bf16.gmra.mxu0 %v804
      %v988 = vpop.f32.mrf.mxu0
      %v989 = vadd.f32 0.0, %v988
      %v990 = vpop.f32.mrf.mxu0
      %v991 = vpop.f32.mrf.mxu0
      %v992 = vadd.f32 0.0, %v991
      %v993 = vpop.f32.mrf.mxu0
      %994 = vmatprep.mubr.bf16.mxu0 0
      %995 = vmatmul.mubr.bf16.gmra.mxu0 %v805
      %v996 = vpop.f32.mrf.mxu0
      %v997 = vadd.f32 0.0, %v996
      %v998 = vpop.f32.mrf.mxu0
      %v999 = vpop.f32.mrf.mxu0
      %v1000 = vadd.f32 0.0, %v999
      %v1001 = vpop.f32.mrf.mxu0
      %1002 = vmatprep.mubr.bf16.mxu0 0
      %1003 = vmatmul.mubr.bf16.gmra.mxu0 %v806
      %v1004 = vpop.f32.mrf.mxu0
      %v1005 = vadd.f32 0.0, %v1004
      %v1006 = vpop.f32.mrf.mxu0
      %v1007 = vpop.f32.mrf.mxu0
      %v1008 = vadd.f32 0.0, %v1007
      %v1009 = vpop.f32.mrf.mxu0
      %1010 = vmatprep.mubr.bf16.mxu0 0
      %1011 = vmatmul.mubr.bf16.gmra.mxu0 %v807
      %v1012 = vpop.f32.mrf.mxu0
      %v1013 = vadd.f32 0.0, %v1012
      %v1014 = vpop.f32.mrf.mxu0
      %v1015 = vpop.f32.mrf.mxu0
      %v1016 = vadd.f32 0.0, %v1015
      %v1017 = vpop.f32.mrf.mxu0
      %1018 = vmatprep.mubr.bf16.mxu0 0
      %1019 = vmatmul.mubr.bf16.gmra.mxu0 %v808
      %v1020 = vpop.f32.mrf.mxu0
      %v1021 = vadd.f32 0.0, %v1020
      %v1022 = vpop.f32.mrf.mxu0
      %v1023 = vpop.f32.mrf.mxu0
      %v1024 = vadd.f32 0.0, %v1023
      %v1025 = vpop.f32.mrf.mxu0
      %1026 = vmatprep.mubr.bf16.mxu0 0
      %1027 = vmatmul.mubr.bf16.gmra.mxu0 %v809
      %v1028 = vpop.f32.mrf.mxu0
      %v1029 = vadd.f32 0.0, %v1028
      %v1030 = vpop.f32.mrf.mxu0
      %v1031 = vpop.f32.mrf.mxu0
      %v1032 = vadd.f32 0.0, %v1031
      %v1033 = vpop.f32.mrf.mxu0
      %1034 = vdwg.mxu0
      %v1035 = vpack.c.bf16 %v912, %v909
      %v1036 = vpack.c.bf16 %v920, %v917
      %v1037 = vpack.c.bf16 %v928, %v925
      %v1038 = vpack.c.bf16 %v936, %v933
      %v1039 = vpack.c.bf16 %v944, %v941
      %v1040 = vpack.c.bf16 %v952, %v949
      %v1041 = vpack.c.bf16 %v960, %v957
      %v1042 = vpack.c.bf16 %v968, %v965
      %v1043 = vpack.c.bf16 %v976, %v973
      %v1044 = vpack.c.bf16 %v984, %v981
      %v1045 = vpack.c.bf16 %v992, %v989
      %v1046 = vpack.c.bf16 %v1000, %v997
      %v1047 = vpack.c.bf16 %v1008, %v1005
      %v1048 = vpack.c.bf16 %v1016, %v1013
      %v1049 = vpack.c.bf16 %v1024, %v1021
      %v1050 = vpack.c.bf16 %v1032, %v1029
      %v1051 = vld [vmem:[%s2 + $0x2] sm:$0x1]
      %v1052 = vpack.c.bf16 %v1051, %v1051
      %v1054 = vpack.i.b16 %v1052, %v1052
      %v1056 = vlaneseq
      %v1057 = vshrl.u32 %v1056, 7
      %v1058 = vsub.s32 0, %v1057
      %v1059 = vrot.slane %v1054, %v1058
      %v1060 = vadd.bf16 %v1035, %v1059
      %v1061 = vadd.bf16 %v1036, %v1059
      %v1062 = vadd.bf16 %v1037, %v1059
      %v1063 = vadd.bf16 %v1038, %v1059
      %v1064 = vadd.bf16 %v1039, %v1059
      %v1065 = vadd.bf16 %v1040, %v1059
      %v1066 = vadd.bf16 %v1041, %v1059
      %v1067 = vadd.bf16 %v1042, %v1059
      %v1068 = vadd.bf16 %v1043, %v1059
      %v1069 = vadd.bf16 %v1044, %v1059
      %v1070 = vadd.bf16 %v1045, %v1059
      %v1071 = vadd.bf16 %v1046, %v1059
      %v1072 = vadd.bf16 %v1047, %v1059
      %v1073 = vadd.bf16 %v1048, %v1059
      %v1074 = vadd.bf16 %v1049, %v1059
      %v1075 = vadd.bf16 %v1050, %v1059
      %v1076 = vmul.bf16 %v1060, 1009007652
      %v1077 = vmul.bf16 %v1061, 1009007652
      %v1078 = vmul.bf16 %v1062, 1009007652
      %v1079 = vmul.bf16 %v1063, 1009007652
      %v1080 = vmul.bf16 %v1064, 1009007652
      %v1081 = vmul.bf16 %v1065, 1009007652
      %v1082 = vmul.bf16 %v1066, 1009007652
      %v1083 = vmul.bf16 %v1067, 1009007652
      %v1084 = vmul.bf16 %v1068, 1009007652
      %v1085 = vmul.bf16 %v1069, 1009007652
      %v1086 = vmul.bf16 %v1070, 1009007652
      %v1087 = vmul.bf16 %v1071, 1009007652
      %v1088 = vmul.bf16 %v1072, 1009007652
      %v1089 = vmul.bf16 %v1073, 1009007652
      %v1090 = vmul.bf16 %v1074, 1009007652
      %v1091 = vmul.bf16 %v1075, 1009007652
      %v1092 = vmax.bf16 %v1060, %v1076
      %v1093 = vmax.bf16 %v1061, %v1077
      %v1094 = vmax.bf16 %v1062, %v1078
      %v1095 = vmax.bf16 %v1063, %v1079
      %v1096 = vmax.bf16 %v1064, %v1080
      %v1097 = vmax.bf16 %v1065, %v1081
      %v1098 = vmax.bf16 %v1066, %v1082
      %v1099 = vmax.bf16 %v1067, %v1083
      %v1100 = vmax.bf16 %v1068, %v1084
      %v1101 = vmax.bf16 %v1069, %v1085
      %v1102 = vmax.bf16 %v1070, %v1086
      %v1103 = vmax.bf16 %v1071, %v1087
      %v1104 = vmax.bf16 %v1072, %v1088
      %v1105 = vmax.bf16 %v1073, %v1089
      %v1106 = vmax.bf16 %v1074, %v1090
      %v1107 = vmax.bf16 %v1075, %v1091
      %v1108 = vld [vmem:[%s1 + $0x88] sm:$0xf]
      %v1109 = vld [vmem:[%s1 + $0x8c] sm:$0xf]
      %v1110 = vld [vmem:[%s1 + $0x90] sm:$0xf]
      %v1111 = vld [vmem:[%s1 + $0x94] sm:$0xf]
      %v1112 = vld [vmem:[%s1 + $0x98] sm:$0xf]
      %v1113 = vld [vmem:[%s1 + $0x9c] sm:$0xf]
      %v1114 = vld [vmem:[%s1 + $0xa0] sm:$0xf]
      %v1115 = vld [vmem:[%s1 + $0xa4] sm:$0xf]
      %v1116 = vld [vmem:[%s1 + $0xa8] sm:$0xf]
      %v1117 = vld [vmem:[%s1 + $0xac] sm:$0xf]
      %v1118 = vld [vmem:[%s1 + $0xb0] sm:$0xf]
      %v1119 = vld [vmem:[%s1 + $0xb4] sm:$0xf]
      %v1120 = vld [vmem:[%s1 + $0xb8] sm:$0xf]
      %v1121 = vld [vmem:[%s1 + $0xbc] sm:$0xf]
      %v1122 = vld [vmem:[%s1 + $0xc0] sm:$0xf]
      %v1123 = vld [vmem:[%s1 + $0xc4] sm:$0xf]
      %v1140 = vunpack.c.l.b16 %v1108
      %v1141 = vunpack.c.l.b16 %v1109
      %v1142 = vunpack.c.l.b16 %v1110
      %v1143 = vunpack.c.l.b16 %v1111
      %v1144 = vunpack.c.l.b16 %v1112
      %v1145 = vunpack.c.l.b16 %v1113
      %v1146 = vunpack.c.l.b16 %v1114
      %v1147 = vunpack.c.l.b16 %v1115
      %v1148 = vunpack.c.l.b16 %v1116
      %v1149 = vunpack.c.l.b16 %v1117
      %v1150 = vunpack.c.l.b16 %v1118
      %v1151 = vunpack.c.l.b16 %v1119
      %v1152 = vunpack.c.l.b16 %v1120
      %v1153 = vunpack.c.l.b16 %v1121
      %v1154 = vunpack.c.l.b16 %v1122
      %v1155 = vunpack.c.l.b16 %v1123
      %v1156 = vpack.c.b16 %v1141, %v1140
      %v1157 = vpack.c.b16 %v1143, %v1142
      %v1158 = vpack.c.b16 %v1145, %v1144
      %v1159 = vpack.c.b16 %v1147, %v1146
      %v1160 = vpack.c.b16 %v1149, %v1148
      %v1161 = vpack.c.b16 %v1151, %v1150
      %v1162 = vpack.c.b16 %v1153, %v1152
      %v1163 = vpack.c.b16 %v1155, %v1154
      %1172 = vmatprep.subr.bf16.mxu0 0
      %1173 = vmatpush1.bf16.msra.mxu0 %v1163
      %1174 = vmatprep.subr.bf16.mxu0 0
      %1175 = vmatpush1.bf16.msra.mxu0 %v1162
      %1176 = vmatprep.subr.bf16.mxu0 0
      %1177 = vmatpush1.bf16.msra.mxu0 %v1161
      %1178 = vmatprep.subr.bf16.mxu0 0
      %1179 = vmatpush1.bf16.msra.mxu0 %v1160
      %1180 = vmatprep.subr.bf16.mxu0 0
      %1181 = vmatpush1.bf16.msra.mxu0 %v1159
      %1182 = vmatprep.subr.bf16.mxu0 0
      %1183 = vmatpush1.bf16.msra.mxu0 %v1158
      %1184 = vmatprep.subr.bf16.mxu0 0
      %1185 = vmatpush1.bf16.msra.mxu0 %v1157
      %1186 = vmatprep.subr.bf16.mxu0 0
      %1187 = vmatpush1.bf16.msra.mxu0 %v1156
      %1188 = vmatprep.subr.bf16.mxu0 0
      %1189 = vmatpush2.bf16.msra.mxu0 0
      %1190 = vmatprep.subr.bf16.mxu0 0
      %1191 = vmatpush2.bf16.msra.mxu0 0
      %1192 = vmatprep.subr.bf16.mxu0 0
      %1193 = vmatpush2.bf16.msra.mxu0 0
      %1194 = vmatprep.subr.bf16.mxu0 0
      %1195 = vmatpush2.bf16.msra.mxu0 0
      %1196 = vmatprep.subr.bf16.mxu0 0
      %1197 = vmatpush2.bf16.msra.mxu0 0
      %1198 = vmatprep.subr.bf16.mxu0 0
      %1199 = vmatpush2.bf16.msra.mxu0 0
      %1200 = vmatprep.subr.bf16.mxu0 0
      %1201 = vmatpush2.bf16.msra.mxu0 0
      %1202 = vmatprep.subr.bf16.mxu0 0
      %1203 = vmatpush2.bf16.msra.mxu0 0
      %1204 = vmatprep.mubr.bf16.mxu0 0
      %1205 = vmatmul.mubr.bf16.gmra.mxu0 %v1092
      %v1206 = vpop.f32.mrf.mxu0
      %v1207 = vadd.f32 0.0, %v1206
      %v1208 = vpop.f32.mrf.mxu0
      %v1209 = vpop.f32.mrf.mxu0
      %v1210 = vadd.f32 0.0, %v1209
      %v1211 = vpop.f32.mrf.mxu0
      %1212 = vmatprep.mubr.bf16.mxu0 0
      %1213 = vmatmul.mubr.bf16.gmra.mxu0 %v1093
      %v1214 = vpop.f32.mrf.mxu0
      %v1215 = vadd.f32 0.0, %v1214
      %v1216 = vpop.f32.mrf.mxu0
      %v1217 = vpop.f32.mrf.mxu0
      %v1218 = vadd.f32 0.0, %v1217
      %v1219 = vpop.f32.mrf.mxu0
      %1220 = vmatprep.mubr.bf16.mxu0 0
      %1221 = vmatmul.mubr.bf16.gmra.mxu0 %v1094
      %v1222 = vpop.f32.mrf.mxu0
      %v1223 = vadd.f32 0.0, %v1222
      %v1224 = vpop.f32.mrf.mxu0
      %v1225 = vpop.f32.mrf.mxu0
      %v1226 = vadd.f32 0.0, %v1225
      %v1227 = vpop.f32.mrf.mxu0
      %1228 = vmatprep.mubr.bf16.mxu0 0
      %1229 = vmatmul.mubr.bf16.gmra.mxu0 %v1095
      %v1230 = vpop.f32.mrf.mxu0
      %v1231 = vadd.f32 0.0, %v1230
      %v1232 = vpop.f32.mrf.mxu0
      %v1233 = vpop.f32.mrf.mxu0
      %v1234 = vadd.f32 0.0, %v1233
      %v1235 = vpop.f32.mrf.mxu0
      %1236 = vmatprep.mubr.bf16.mxu0 0
      %1237 = vmatmul.mubr.bf16.gmra.mxu0 %v1096
      %v1238 = vpop.f32.mrf.mxu0
      %v1239 = vadd.f32 0.0, %v1238
      %v1240 = vpop.f32.mrf.mxu0
      %v1241 = vpop.f32.mrf.mxu0
      %v1242 = vadd.f32 0.0, %v1241
      %v1243 = vpop.f32.mrf.mxu0
      %1244 = vmatprep.mubr.bf16.mxu0 0
      %1245 = vmatmul.mubr.bf16.gmra.mxu0 %v1097
      %v1246 = vpop.f32.mrf.mxu0
      %v1247 = vadd.f32 0.0, %v1246
      %v1248 = vpop.f32.mrf.mxu0
      %v1249 = vpop.f32.mrf.mxu0
      %v1250 = vadd.f32 0.0, %v1249
      %v1251 = vpop.f32.mrf.mxu0
      %1252 = vmatprep.mubr.bf16.mxu0 0
      %1253 = vmatmul.mubr.bf16.gmra.mxu0 %v1098
      %v1254 = vpop.f32.mrf.mxu0
      %v1255 = vadd.f32 0.0, %v1254
      %v1256 = vpop.f32.mrf.mxu0
      %v1257 = vpop.f32.mrf.mxu0
      %v1258 = vadd.f32 0.0, %v1257
      %v1259 = vpop.f32.mrf.mxu0
      %1260 = vmatprep.mubr.bf16.mxu0 0
      %1261 = vmatmul.mubr.bf16.gmra.mxu0 %v1099
      %v1262 = vpop.f32.mrf.mxu0
      %v1263 = vadd.f32 0.0, %v1262
      %v1264 = vpop.f32.mrf.mxu0
      %v1265 = vpop.f32.mrf.mxu0
      %v1266 = vadd.f32 0.0, %v1265
      %v1267 = vpop.f32.mrf.mxu0
      %1268 = vmatprep.mubr.bf16.mxu0 0
      %1269 = vmatmul.mubr.bf16.gmra.mxu0 %v1100
      %v1270 = vpop.f32.mrf.mxu0
      %v1271 = vadd.f32 0.0, %v1270
      %v1272 = vpop.f32.mrf.mxu0
      %v1273 = vpop.f32.mrf.mxu0
      %v1274 = vadd.f32 0.0, %v1273
      %v1275 = vpop.f32.mrf.mxu0
      %1276 = vmatprep.mubr.bf16.mxu0 0
      %1277 = vmatmul.mubr.bf16.gmra.mxu0 %v1101
      %v1278 = vpop.f32.mrf.mxu0
      %v1279 = vadd.f32 0.0, %v1278
      %v1280 = vpop.f32.mrf.mxu0
      %v1281 = vpop.f32.mrf.mxu0
      %v1282 = vadd.f32 0.0, %v1281
      %v1283 = vpop.f32.mrf.mxu0
      %1284 = vmatprep.mubr.bf16.mxu0 0
      %1285 = vmatmul.mubr.bf16.gmra.mxu0 %v1102
      %v1286 = vpop.f32.mrf.mxu0
      %v1287 = vadd.f32 0.0, %v1286
      %v1288 = vpop.f32.mrf.mxu0
      %v1289 = vpop.f32.mrf.mxu0
      %v1290 = vadd.f32 0.0, %v1289
      %v1291 = vpop.f32.mrf.mxu0
      %1292 = vmatprep.mubr.bf16.mxu0 0
      %1293 = vmatmul.mubr.bf16.gmra.mxu0 %v1103
      %v1294 = vpop.f32.mrf.mxu0
      %v1295 = vadd.f32 0.0, %v1294
      %v1296 = vpop.f32.mrf.mxu0
      %v1297 = vpop.f32.mrf.mxu0
      %v1298 = vadd.f32 0.0, %v1297
      %v1299 = vpop.f32.mrf.mxu0
      %1300 = vmatprep.mubr.bf16.mxu0 0
      %1301 = vmatmul.mubr.bf16.gmra.mxu0 %v1104
      %v1302 = vpop.f32.mrf.mxu0
      %v1303 = vadd.f32 0.0, %v1302
      %v1304 = vpop.f32.mrf.mxu0
      %v1305 = vpop.f32.mrf.mxu0
      %v1306 = vadd.f32 0.0, %v1305
      %v1307 = vpop.f32.mrf.mxu0
      %1308 = vmatprep.mubr.bf16.mxu0 0
      %1309 = vmatmul.mubr.bf16.gmra.mxu0 %v1105
      %v1310 = vpop.f32.mrf.mxu0
      %v1311 = vadd.f32 0.0, %v1310
      %v1312 = vpop.f32.mrf.mxu0
      %v1313 = vpop.f32.mrf.mxu0
      %v1314 = vadd.f32 0.0, %v1313
      %v1315 = vpop.f32.mrf.mxu0
      %1316 = vmatprep.mubr.bf16.mxu0 0
      %1317 = vmatmul.mubr.bf16.gmra.mxu0 %v1106
      %v1318 = vpop.f32.mrf.mxu0
      %v1319 = vadd.f32 0.0, %v1318
      %v1320 = vpop.f32.mrf.mxu0
      %v1321 = vpop.f32.mrf.mxu0
      %v1322 = vadd.f32 0.0, %v1321
      %v1323 = vpop.f32.mrf.mxu0
      %1324 = vmatprep.mubr.bf16.mxu0 0
      %1325 = vmatmul.mubr.bf16.gmra.mxu0 %v1107
      %v1326 = vpop.f32.mrf.mxu0
      %v1327 = vadd.f32 0.0, %v1326
      %v1328 = vpop.f32.mrf.mxu0
      %v1329 = vpop.f32.mrf.mxu0
      %v1330 = vadd.f32 0.0, %v1329
      %v1331 = vpop.f32.mrf.mxu0
      %1332 = vdwg.mxu0
      %v1333 = vpack.c.bf16 %v1210, %v1207
      %v1334 = vpack.c.bf16 %v1218, %v1215
      %v1335 = vpack.c.bf16 %v1226, %v1223
      %v1336 = vpack.c.bf16 %v1234, %v1231
      %v1337 = vpack.c.bf16 %v1242, %v1239
      %v1338 = vpack.c.bf16 %v1250, %v1247
      %v1339 = vpack.c.bf16 %v1258, %v1255
      %v1340 = vpack.c.bf16 %v1266, %v1263
      %v1341 = vpack.c.bf16 %v1274, %v1271
      %v1342 = vpack.c.bf16 %v1282, %v1279
      %v1343 = vpack.c.bf16 %v1290, %v1287
      %v1344 = vpack.c.bf16 %v1298, %v1295
      %v1345 = vpack.c.bf16 %v1306, %v1303
      %v1346 = vpack.c.bf16 %v1314, %v1311
      %v1347 = vpack.c.bf16 %v1322, %v1319
      %v1348 = vpack.c.bf16 %v1330, %v1327
      %v1349 = vld [vmem:[%s2 + $0x3] sm:$0x1]
      %v1350 = vpack.c.bf16 %v1349, %v1349
      %v1352 = vpack.i.b16 %v1350, %v1350
      %v1354 = vlaneseq
      %v1355 = vshrl.u32 %v1354, 7
      %v1356 = vsub.s32 0, %v1355
      %v1357 = vrot.slane %v1352, %v1356
      %v1358 = vadd.bf16 %v1333, %v1357
      %v1359 = vadd.bf16 %v1334, %v1357
      %v1360 = vadd.bf16 %v1335, %v1357
      %v1361 = vadd.bf16 %v1336, %v1357
      %v1362 = vadd.bf16 %v1337, %v1357
      %v1363 = vadd.bf16 %v1338, %v1357
      %v1364 = vadd.bf16 %v1339, %v1357
      %v1365 = vadd.bf16 %v1340, %v1357
      %v1366 = vadd.bf16 %v1341, %v1357
      %v1367 = vadd.bf16 %v1342, %v1357
      %v1368 = vadd.bf16 %v1343, %v1357
      %v1369 = vadd.bf16 %v1344, %v1357
      %v1370 = vadd.bf16 %v1345, %v1357
      %v1371 = vadd.bf16 %v1346, %v1357
      %v1372 = vadd.bf16 %v1347, %v1357
      %v1373 = vadd.bf16 %v1348, %v1357
      %v1374 = vmul.bf16 %v1358, 1009007652
      %v1375 = vmul.bf16 %v1359, 1009007652
      %v1376 = vmul.bf16 %v1360, 1009007652
      %v1377 = vmul.bf16 %v1361, 1009007652
      %v1378 = vmul.bf16 %v1362, 1009007652
      %v1379 = vmul.bf16 %v1363, 1009007652
      %v1380 = vmul.bf16 %v1364, 1009007652
      %v1381 = vmul.bf16 %v1365, 1009007652
      %v1382 = vmul.bf16 %v1366, 1009007652
      %v1383 = vmul.bf16 %v1367, 1009007652
      %v1384 = vmul.bf16 %v1368, 1009007652
      %v1385 = vmul.bf16 %v1369, 1009007652
      %v1386 = vmul.bf16 %v1370, 1009007652
      %v1387 = vmul.bf16 %v1371, 1009007652
      %v1388 = vmul.bf16 %v1372, 1009007652
      %v1389 = vmul.bf16 %v1373, 1009007652
      %v1390 = vmax.bf16 %v1358, %v1374
      %v1391 = vmax.bf16 %v1359, %v1375
      %v1392 = vmax.bf16 %v1360, %v1376
      %v1393 = vmax.bf16 %v1361, %v1377
      %v1394 = vmax.bf16 %v1362, %v1378
      %v1395 = vmax.bf16 %v1363, %v1379
      %v1396 = vmax.bf16 %v1364, %v1380
      %v1397 = vmax.bf16 %v1365, %v1381
      %v1398 = vmax.bf16 %v1366, %v1382
      %v1399 = vmax.bf16 %v1367, %v1383
      %v1400 = vmax.bf16 %v1368, %v1384
      %v1401 = vmax.bf16 %v1369, %v1385
      %v1402 = vmax.bf16 %v1370, %v1386
      %v1403 = vmax.bf16 %v1371, %v1387
      %v1404 = vmax.bf16 %v1372, %v1388
      %v1405 = vmax.bf16 %v1373, %v1389
      %v1406 = vld [vmem:[%s1 + $0xc8] sm:$0xf]
      %v1407 = vld [vmem:[%s1 + $0xcc] sm:$0xf]
      %v1408 = vld [vmem:[%s1 + $0xd0] sm:$0xf]
      %v1409 = vld [vmem:[%s1 + $0xd4] sm:$0xf]
      %v1410 = vld [vmem:[%s1 + $0xd8] sm:$0xf]
      %v1411 = vld [vmem:[%s1 + $0xdc] sm:$0xf]
      %v1412 = vld [vmem:[%s1 + $0xe0] sm:$0xf]
      %v1413 = vld [vmem:[%s1 + $0xe4] sm:$0xf]
      %v1414 = vld [vmem:[%s1 + $0xe8] sm:$0xf]
      %v1415 = vld [vmem:[%s1 + $0xec] sm:$0xf]
      %v1416 = vld [vmem:[%s1 + $0xf0] sm:$0xf]
      %v1417 = vld [vmem:[%s1 + $0xf4] sm:$0xf]
      %v1418 = vld [vmem:[%s1 + $0xf8] sm:$0xf]
      %v1419 = vld [vmem:[%s1 + $0xfc] sm:$0xf]
      %v1420 = vld [vmem:[%s1 + $0x100] sm:$0xf]
      %v1421 = vld [vmem:[%s1 + $0x104] sm:$0xf]
      %v1422 = vld [vmem:[%s2 + $0x4] sm:$0x1]
      %v1423 = vlaneseq
      %v1424 = vshrl.u32 %v1423, 7
      %v1425 = vsub.s32 0, %v1424
      %v1426 = vrot.slane %v1422, %v1425
      %v1443 = vunpack.c.l.b16 %v1406
      %v1444 = vunpack.c.l.b16 %v1407
      %v1445 = vunpack.c.l.b16 %v1408
      %v1446 = vunpack.c.l.b16 %v1409
      %v1447 = vunpack.c.l.b16 %v1410
      %v1448 = vunpack.c.l.b16 %v1411
      %v1449 = vunpack.c.l.b16 %v1412
      %v1450 = vunpack.c.l.b16 %v1413
      %v1451 = vunpack.c.l.b16 %v1414
      %v1452 = vunpack.c.l.b16 %v1415
      %v1453 = vunpack.c.l.b16 %v1416
      %v1454 = vunpack.c.l.b16 %v1417
      %v1455 = vunpack.c.l.b16 %v1418
      %v1456 = vunpack.c.l.b16 %v1419
      %v1457 = vunpack.c.l.b16 %v1420
      %v1458 = vunpack.c.l.b16 %v1421
      %v1459 = vpack.c.b16 %v1444, %v1443
      %v1460 = vpack.c.b16 %v1446, %v1445
      %v1461 = vpack.c.b16 %v1448, %v1447
      %v1462 = vpack.c.b16 %v1450, %v1449
      %v1463 = vpack.c.b16 %v1452, %v1451
      %v1464 = vpack.c.b16 %v1454, %v1453
      %v1465 = vpack.c.b16 %v1456, %v1455
      %v1466 = vpack.c.b16 %v1458, %v1457
      %1475 = vmatprep.subr.bf16.mxu0 0
      %1476 = vmatpush1.bf16.msra.mxu0 %v1466
      %1477 = vmatprep.subr.bf16.mxu0 0
      %1478 = vmatpush1.bf16.msra.mxu0 %v1465
      %1479 = vmatprep.subr.bf16.mxu0 0
      %1480 = vmatpush1.bf16.msra.mxu0 %v1464
      %1481 = vmatprep.subr.bf16.mxu0 0
      %1482 = vmatpush1.bf16.msra.mxu0 %v1463
      %1483 = vmatprep.subr.bf16.mxu0 0
      %1484 = vmatpush1.bf16.msra.mxu0 %v1462
      %1485 = vmatprep.subr.bf16.mxu0 0
      %1486 = vmatpush1.bf16.msra.mxu0 %v1461
      %1487 = vmatprep.subr.bf16.mxu0 0
      %1488 = vmatpush1.bf16.msra.mxu0 %v1460
      %1489 = vmatprep.subr.bf16.mxu0 0
      %1490 = vmatpush1.bf16.msra.mxu0 %v1459
      %1491 = vmatprep.subr.bf16.mxu0 0
      %1492 = vmatpush2.bf16.msra.mxu0 0
      %1493 = vmatprep.subr.bf16.mxu0 0
      %1494 = vmatpush2.bf16.msra.mxu0 0
      %1495 = vmatprep.subr.bf16.mxu0 0
      %1496 = vmatpush2.bf16.msra.mxu0 0
      %1497 = vmatprep.subr.bf16.mxu0 0
      %1498 = vmatpush2.bf16.msra.mxu0 0
      %1499 = vmatprep.subr.bf16.mxu0 0
      %1500 = vmatpush2.bf16.msra.mxu0 0
      %1501 = vmatprep.subr.bf16.mxu0 0
      %1502 = vmatpush2.bf16.msra.mxu0 0
      %1503 = vmatprep.subr.bf16.mxu0 0
      %1504 = vmatpush2.bf16.msra.mxu0 0
      %1505 = vmatprep.subr.bf16.mxu0 0
      %1506 = vmatpush2.bf16.msra.mxu0 0
      %1507 = vmatprep.mubr.bf16.mxu0 0
      %1508 = vmatmul.mubr.bf16.gmra.mxu0 %v1390
      %v1509 = vpop.f32.mrf.mxu0
      %v1510 = vadd.f32 %v1426, %v1509
      %v1511 = vpop.f32.mrf.mxu0
      %v1512 = vpop.f32.mrf.mxu0
      %v1513 = vadd.f32 %v1426, %v1512
      %v1514 = vpop.f32.mrf.mxu0
      %1515 = vmatprep.mubr.bf16.mxu0 0
      %1516 = vmatmul.mubr.bf16.gmra.mxu0 %v1391
      %v1517 = vpop.f32.mrf.mxu0
      %v1518 = vadd.f32 %v1426, %v1517
      %v1519 = vpop.f32.mrf.mxu0
      %v1520 = vpop.f32.mrf.mxu0
      %v1521 = vadd.f32 %v1426, %v1520
      %v1522 = vpop.f32.mrf.mxu0
      %1523 = vmatprep.mubr.bf16.mxu0 0
      %1524 = vmatmul.mubr.bf16.gmra.mxu0 %v1392
      %v1525 = vpop.f32.mrf.mxu0
      %v1526 = vadd.f32 %v1426, %v1525
      %v1527 = vpop.f32.mrf.mxu0
      %v1528 = vpop.f32.mrf.mxu0
      %v1529 = vadd.f32 %v1426, %v1528
      %v1530 = vpop.f32.mrf.mxu0
      %1531 = vmatprep.mubr.bf16.mxu0 0
      %1532 = vmatmul.mubr.bf16.gmra.mxu0 %v1393
      %v1533 = vpop.f32.mrf.mxu0
      %v1534 = vadd.f32 %v1426, %v1533
      %v1535 = vpop.f32.mrf.mxu0
      %v1536 = vpop.f32.mrf.mxu0
      %v1537 = vadd.f32 %v1426, %v1536
      %v1538 = vpop.f32.mrf.mxu0
      %1539 = vmatprep.mubr.bf16.mxu0 0
      %1540 = vmatmul.mubr.bf16.gmra.mxu0 %v1394
      %v1541 = vpop.f32.mrf.mxu0
      %v1542 = vadd.f32 %v1426, %v1541
      %v1543 = vpop.f32.mrf.mxu0
      %v1544 = vpop.f32.mrf.mxu0
      %v1545 = vadd.f32 %v1426, %v1544
      %v1546 = vpop.f32.mrf.mxu0
      %1547 = vmatprep.mubr.bf16.mxu0 0
      %1548 = vmatmul.mubr.bf16.gmra.mxu0 %v1395
      %v1549 = vpop.f32.mrf.mxu0
      %v1550 = vadd.f32 %v1426, %v1549
      %v1551 = vpop.f32.mrf.mxu0
      %v1552 = vpop.f32.mrf.mxu0
      %v1553 = vadd.f32 %v1426, %v1552
      %v1554 = vpop.f32.mrf.mxu0
      %1555 = vmatprep.mubr.bf16.mxu0 0
      %1556 = vmatmul.mubr.bf16.gmra.mxu0 %v1396
      %v1557 = vpop.f32.mrf.mxu0
      %v1558 = vadd.f32 %v1426, %v1557
      %v1559 = vpop.f32.mrf.mxu0
      %v1560 = vpop.f32.mrf.mxu0
      %v1561 = vadd.f32 %v1426, %v1560
      %v1562 = vpop.f32.mrf.mxu0
      %1563 = vmatprep.mubr.bf16.mxu0 0
      %1564 = vmatmul.mubr.bf16.gmra.mxu0 %v1397
      %v1565 = vpop.f32.mrf.mxu0
      %v1566 = vadd.f32 %v1426, %v1565
      %v1567 = vpop.f32.mrf.mxu0
      %v1568 = vpop.f32.mrf.mxu0
      %v1569 = vadd.f32 %v1426, %v1568
      %v1570 = vpop.f32.mrf.mxu0
      %1571 = vmatprep.mubr.bf16.mxu0 0
      %1572 = vmatmul.mubr.bf16.gmra.mxu0 %v1398
      %v1573 = vpop.f32.mrf.mxu0
      %v1574 = vadd.f32 %v1426, %v1573
      %v1575 = vpop.f32.mrf.mxu0
      %v1576 = vpop.f32.mrf.mxu0
      %v1577 = vadd.f32 %v1426, %v1576
      %v1578 = vpop.f32.mrf.mxu0
      %1579 = vmatprep.mubr.bf16.mxu0 0
      %1580 = vmatmul.mubr.bf16.gmra.mxu0 %v1399
      %v1581 = vpop.f32.mrf.mxu0
      %v1582 = vadd.f32 %v1426, %v1581
      %v1583 = vpop.f32.mrf.mxu0
      %v1584 = vpop.f32.mrf.mxu0
      %v1585 = vadd.f32 %v1426, %v1584
      %v1586 = vpop.f32.mrf.mxu0
      %1587 = vmatprep.mubr.bf16.mxu0 0
      %1588 = vmatmul.mubr.bf16.gmra.mxu0 %v1400
      %v1589 = vpop.f32.mrf.mxu0
      %v1590 = vadd.f32 %v1426, %v1589
      %v1591 = vpop.f32.mrf.mxu0
      %v1592 = vpop.f32.mrf.mxu0
      %v1593 = vadd.f32 %v1426, %v1592
      %v1594 = vpop.f32.mrf.mxu0
      %1595 = vmatprep.mubr.bf16.mxu0 0
      %1596 = vmatmul.mubr.bf16.gmra.mxu0 %v1401
      %v1597 = vpop.f32.mrf.mxu0
      %v1598 = vadd.f32 %v1426, %v1597
      %v1599 = vpop.f32.mrf.mxu0
      %v1600 = vpop.f32.mrf.mxu0
      %v1601 = vadd.f32 %v1426, %v1600
      %v1602 = vpop.f32.mrf.mxu0
      %1603 = vmatprep.mubr.bf16.mxu0 0
      %1604 = vmatmul.mubr.bf16.gmra.mxu0 %v1402
      %v1605 = vpop.f32.mrf.mxu0
      %v1606 = vadd.f32 %v1426, %v1605
      %v1607 = vpop.f32.mrf.mxu0
      %v1608 = vpop.f32.mrf.mxu0
      %v1609 = vadd.f32 %v1426, %v1608
      %v1610 = vpop.f32.mrf.mxu0
      %1611 = vmatprep.mubr.bf16.mxu0 0
      %1612 = vmatmul.mubr.bf16.gmra.mxu0 %v1403
      %v1613 = vpop.f32.mrf.mxu0
      %v1614 = vadd.f32 %v1426, %v1613
      %v1615 = vpop.f32.mrf.mxu0
      %v1616 = vpop.f32.mrf.mxu0
      %v1617 = vadd.f32 %v1426, %v1616
      %v1618 = vpop.f32.mrf.mxu0
      %1619 = vmatprep.mubr.bf16.mxu0 0
      %1620 = vmatmul.mubr.bf16.gmra.mxu0 %v1404
      %v1621 = vpop.f32.mrf.mxu0
      %v1622 = vadd.f32 %v1426, %v1621
      %v1623 = vpop.f32.mrf.mxu0
      %v1624 = vpop.f32.mrf.mxu0
      %v1625 = vadd.f32 %v1426, %v1624
      %v1626 = vpop.f32.mrf.mxu0
      %1627 = vmatprep.mubr.bf16.mxu0 0
      %1628 = vmatmul.mubr.bf16.gmra.mxu0 %v1405
      %v1629 = vpop.f32.mrf.mxu0
      %v1630 = vadd.f32 %v1426, %v1629
      %v1631 = vpop.f32.mrf.mxu0
      %v1632 = vpop.f32.mrf.mxu0
      %v1633 = vadd.f32 %v1426, %v1632
      %v1634 = vpop.f32.mrf.mxu0
      %1635 = vdwg.mxu0
      %vm1636 = vcmask 31744
      %1637 = vst.msk [vmem:[%s172] sm:$0xff] %vm1636, %v1510
      %1638 = vst.msk [vmem:[%s172 + $0x8] sm:$0xff] %vm1636, %v1513
      %1639 = vst.msk [vmem:[%s172 + $0x10] sm:$0xff] %vm1636, %v1518
      %1640 = vst.msk [vmem:[%s172 + $0x18] sm:$0xff] %vm1636, %v1521
      %1641 = vst.msk [vmem:[%s172 + $0x20] sm:$0xff] %vm1636, %v1526
      %1642 = vst.msk [vmem:[%s172 + $0x28] sm:$0xff] %vm1636, %v1529
      %1643 = vst.msk [vmem:[%s172 + $0x30] sm:$0xff] %vm1636, %v1534
      %1644 = vst.msk [vmem:[%s172 + $0x38] sm:$0xff] %vm1636, %v1537
      %1645 = vst.msk [vmem:[%s172 + $0x40] sm:$0xff] %vm1636, %v1542
      %1646 = vst.msk [vmem:[%s172 + $0x48] sm:$0xff] %vm1636, %v1545
      %1647 = vst.msk [vmem:[%s172 + $0x50] sm:$0xff] %vm1636, %v1550
      %1648 = vst.msk [vmem:[%s172 + $0x58] sm:$0xff] %vm1636, %v1553
      %1649 = vst.msk [vmem:[%s172 + $0x60] sm:$0xff] %vm1636, %v1558
      %1650 = vst.msk [vmem:[%s172 + $0x68] sm:$0xff] %vm1636, %v1561
      %1651 = vst.msk [vmem:[%s172 + $0x70] sm:$0xff] %vm1636, %v1566
      %1652 = vst.msk [vmem:[%s172 + $0x78] sm:$0xff] %vm1636, %v1569
      %1653 = vst.msk [vmem:[%s172 + $0x80] sm:$0xff] %vm1636, %v1574
      %1654 = vst.msk [vmem:[%s172 + $0x88] sm:$0xff] %vm1636, %v1577
      %1655 = vst.msk [vmem:[%s172 + $0x90] sm:$0xff] %vm1636, %v1582
      %1656 = vst.msk [vmem:[%s172 + $0x98] sm:$0xff] %vm1636, %v1585
      %1657 = vst.msk [vmem:[%s172 + $0xa0] sm:$0xff] %vm1636, %v1590
      %1658 = vst.msk [vmem:[%s172 + $0xa8] sm:$0xff] %vm1636, %v1593
      %1659 = vst.msk [vmem:[%s172 + $0xb0] sm:$0xff] %vm1636, %v1598
      %1660 = vst.msk [vmem:[%s172 + $0xb8] sm:$0xff] %vm1636, %v1601
      %1661 = vst.msk [vmem:[%s172 + $0xc0] sm:$0xff] %vm1636, %v1606
      %1662 = vst.msk [vmem:[%s172 + $0xc8] sm:$0xff] %vm1636, %v1609
      %1663 = vst.msk [vmem:[%s172 + $0xd0] sm:$0xff] %vm1636, %v1614
      %1664 = vst.msk [vmem:[%s172 + $0xd8] sm:$0xff] %vm1636, %v1617
      %1665 = vst.msk [vmem:[%s172 + $0xe0] sm:$0xff] %vm1636, %v1622
      %1666 = vst.msk [vmem:[%s172 + $0xe8] sm:$0xff] %vm1636, %v1625
      %1667 = vst.msk [vmem:[%s172 + $0xf0] sm:$0xff] %vm1636, %v1630
      %1668 = vst.msk [vmem:[%s172 + $0xf8] sm:$0xff] %vm1636, %v1633
      %s1669 = smul.u32 32, %s14
      %p1670 = scmp.lt.s32.totalorder %s1669, 63
      %s1671 = scalar_select %p1670, %s1669, 63
      %s1672 = smul.addr %s1671, 8
      %s1673 = scalar_lea.vmem %s3, %s1672
      // Predicated region
      $region33: #{tpu_custom_call.1} parent=31 // pred_check
        %p1674 = pneg %p100
      $region34: #{tpu_custom_call.1} parent=31 // pred_check_branch
        %1676 = sbr.rel (%p1674) target = $region36
      $region35: #{tpu_custom_call.1} parent=31 // pred_region
        %s1677 = smul.u32 32, %s14
      $region36: #{tpu_custom_call.1} parent=31 // pred_fallthru
        _
    $region32: #{tpu_custom_call.1} parent=5 // pred_fallthru
      _
    %p1678 = scmp.le.s32.totalorder 2, %s9
    // Predicated region
    $region37: #{tpu_custom_call.1} parent=5 // pred_check
      %p1679 = pneg %p1678
    $region38: #{tpu_custom_call.1} parent=5 // pred_check_branch
      %1681 = sbr.rel (%p1679) target = $region40
    $region39: #{tpu_custom_call.1} parent=5 // pred_region
      %s1682 = ssub.s32 %s9, 2
      // Predicated region
      $region41: #{tpu_custom_call.1} parent=39 // pred_check
        %p1683 = pneg %p106
      $region42: #{tpu_custom_call.1} parent=39 // pred_check_branch
        %1685 = sbr.rel (%p1683) target = $region44
      $region43: #{tpu_custom_call.1} parent=39 // pred_region
        %s1686 = smul.u32 32, %s15
        %p1687 = scmp.lt.s32.totalorder %s1686, 63
        %s1688 = scalar_select %p1687, %s1686, 63
        %s1689 = smul.addr %s1688, 8
        %s1690 = scalar_lea.vmem %s3, %s1689
      $region44: #{tpu_custom_call.1} parent=39 // pred_fallthru
        _
    $region40: #{tpu_custom_call.1} parent=5 // pred_fallthru
      _
  $region6: #{tpu_custom_call.1} parent=0 // loop_footer
    %s13 = sadd.s32 1, %s9
  $region7: #{tpu_custom_call.1} parent=0 // loop_footer_branch
    %8 = sbr.rel target = $region3
  $region8: #{tpu_custom_call.1} parent=0 // loop_exit
    _

</llo_original>
